<compile_context>
chip_gen: v7x
topology: tpu7x:2x2x1
jax: 0.10.0
libtpu: 0.0.40
codegen_flags: <defaults>
</compile_context>

<pallas_src>
import functools

import jax
import jax.numpy as jnp
from jax.experimental import pallas as pl
from jax.experimental.pallas import tpu as pltpu


_TILE_N = 1024  # row / reduction tile for the large-graph (tiled) fallback


def _round_up(x, m):
    return ((x + m - 1) // m) * m


def _vmem_capacity_bytes():
    """Physical VMEM per TensorCore (gen-aware); conservative fallback."""
    try:
        info = pltpu.get_tpu_info()
        cap = getattr(info, "vmem_capacity_bytes", None)
        if cap:
            return int(cap)
    except Exception:
        pass
    return 64 * 1024 * 1024  # assume v7x-sized VMEM if we cannot query


def _vmem_limit_bytes(capacity):
    if capacity >= 128 * 1024 * 1024:
        # v5e / v6e: use most of the 128 MiB.
        return 104 * 1024 * 1024
    # v7x (64 MiB per TC) or unknown: leave headroom.
    return max(min(capacity - 8 * 1024 * 1024, 56 * 1024 * 1024),
               32 * 1024 * 1024)


# --------------------- fused whole-encoder kernel (A resident) ---------------
def _fused_encoder_kernel(a_ref, x_ref, w1_ref, b1_ref, w2_ref, b2_ref,
                          w3_ref, b3_ref, wh_ref, bh_ref, o_ref):
    """All 4 GCN layers with A_hat resident in VMEM (read from HBM once)."""
    a = a_ref[...]  # (n_pad, n_pad) bf16, resident

    def layer(h, w_ref, b_ref, relu):
        # Transform first (PyG order): T = H @ W   (bf16 x bf16 -> f32 acc)
        t = jnp.dot(h, w_ref[...], preferred_element_type=jnp.float32)
        t = t.astype(jnp.bfloat16)
        # Aggregate: A_hat @ T  (bf16 x bf16 -> f32 acc on the MXU)
        out = jnp.dot(a, t, preferred_element_type=jnp.float32) + b_ref[...]
        if relu:
            out = jnp.maximum(out, 0.0)
        return out.astype(jnp.bfloat16)

    h = layer(x_ref[...], w1_ref, b1_ref, True)
    h = layer(h, w2_ref, b2_ref, True)
    h = layer(h, w3_ref, b3_ref, True)
    o_ref[...] = layer(h, wh_ref, bh_ref, False)


# --------------------- tiled per-layer kernel (fallback) ---------------------
def _gcn_layer_kernel(a_ref, h_ref, w_ref, b_ref, o_ref, acc_ref, *,
                      apply_relu, tile_n, h_resident):
    """One (row-tile, k-tile) step of  out = relu((A_hat @ H) @ W + b)."""
    k = pl.program_id(1)

    @pl.when(k == 0)
    def _():
        acc_ref[...] = jnp.zeros_like(acc_ref)

    if h_resident:
        # H is a single resident VMEM copy; slice the k-slab in-kernel.
        start = pl.multiple_of(k * tile_n, tile_n)
        h_blk = h_ref[pl.ds(start, tile_n), :]
    else:
        h_blk = h_ref[...]

    # Aggregation: bf16 x bf16 -> f32 accumulate on the MXU.
    acc_ref[...] += jnp.dot(a_ref[...], h_blk,
                            preferred_element_type=jnp.float32)

    @pl.when(k == pl.num_programs(1) - 1)
    def _():
        # Fused epilogue: bf16 feature transform + f32 bias (+ ReLU).
        out = jnp.dot(acc_ref[...].astype(jnp.bfloat16), w_ref[...],
                      preferred_element_type=jnp.float32)
        out = out + b_ref[...]
        if apply_relu:
            out = jnp.maximum(out, 0.0)
        o_ref[...] = out.astype(o_ref.dtype)


def _pad_wb(w, b, f_in_pad, f_out_pad):
    """Zero-pad weight (bf16) / bias (f32) to lane-dense shapes (exact)."""
    f_in, f_out = w.shape
    w_p = (jnp.zeros((f_in_pad, f_out_pad), jnp.bfloat16)
           .at[:f_in, :f_out].set(w.astype(jnp.bfloat16)))
    b_p = jnp.zeros((1, f_out_pad), jnp.float32).at[0, :f_out].set(b)
    return w_p, b_p


def gcn_conv(a_pad, h_pad, w, b, *, tile_n, apply_relu, out_dtype, vmem_limit):
    """One GCNConv layer on padded operands as a tiled, pipelined Pallas call."""
    n_pad = a_pad.shape[0]
    f_in_pad = h_pad.shape[1]
    f_out = w.shape[1]
    f_out_pad = _round_up(f_out, 128)
    w_pad, b_pad = _pad_wb(w, b, f_in_pad, f_out_pad)

    # Keep H resident (fetched once per layer) when it comfortably fits.
    h_bytes = n_pad * f_in_pad * h_pad.dtype.itemsize
    h_resident = h_bytes <= vmem_limit // 4

    grid = (n_pad // tile_n, n_pad // tile_n)
    kernel = functools.partial(_gcn_layer_kernel, apply_relu=apply_relu,
                               tile_n=tile_n, h_resident=h_resident)

    if h_resident:
        h_spec = pl.BlockSpec((n_pad, f_in_pad), lambda i, k: (0, 0))
    else:
        h_spec = pl.BlockSpec((tile_n, f_in_pad), lambda i, k: (k, 0))

    return pl.pallas_call(
        kernel,
        out_shape=jax.ShapeDtypeStruct((n_pad, f_out_pad), out_dtype),
        grid_spec=pltpu.PrefetchScalarGridSpec(
            num_scalar_prefetch=0,
            grid=grid,
            in_specs=[
                pl.BlockSpec((tile_n, tile_n), lambda i, k: (i, k)),       # A tile
                h_spec,                                                    # H
                pl.BlockSpec((f_in_pad, f_out_pad), lambda i, k: (0, 0)),  # W (bf16)
                pl.BlockSpec((1, f_out_pad), lambda i, k: (0, 0)),         # bias
            ],
            out_specs=pl.BlockSpec((tile_n, f_out_pad), lambda i, k: (i, 0)),
            scratch_shapes=[pltpu.VMEM((tile_n, f_in_pad), jnp.float32)],
        ),
        compiler_params=pltpu.CompilerParams(
            dimension_semantics=("parallel", "arbitrary"),
            vmem_limit_bytes=vmem_limit,
        ),
    )(a_pad, h_pad, w_pad, b_pad)


# ------------------------------- JAX glue ------------------------------------
def normalized_adjacency(edge_index, num_nodes):
    """Dense A_hat = D^{-1/2}(A + I)D^{-1/2} (PyG gcn_norm semantics:
    scatter-add of unit edge weights + add_remaining_self_loops)."""
    src = edge_index[0]
    dst = edge_index[1]
    a = jnp.zeros((num_nodes, num_nodes), jnp.float32).at[dst, src].add(1.0)
    diag = jnp.diagonal(a)
    a = a + jnp.diag(jnp.where(diag == 0.0, 1.0, 0.0))  # only missing self-loops
    deg = jnp.sum(a, axis=1)
    d_inv_sqrt = jnp.where(deg > 0.0, 1.0 / jnp.sqrt(jnp.maximum(deg, 1e-12)), 0.0)
    return a * d_inv_sqrt[:, None] * d_inv_sqrt[None, :]


def glorot(key, shape):
    fan_in, fan_out = shape
    limit = jnp.sqrt(6.0 / (fan_in + fan_out))
    return jax.random.uniform(key, shape, jnp.float32, -limit, limit)


def init_params(key, in_channels, out_channels):
    dims = [
        (in_channels, 2 * in_channels),      # conv1
        (2 * in_channels, 4 * in_channels),  # conv2
        (4 * in_channels, 8 * in_channels),  # conv3
        (8 * in_channels, out_channels),     # conv_mu
        (8 * in_channels, out_channels),     # conv_logstd
    ]
    keys = jax.random.split(key, len(dims))
    params = []
    for k, (fi, fo) in zip(keys, dims):
        params.append({"w": glorot(k, (fi, fo)), "b": jnp.zeros((fo,), jnp.float32)})
    return params


def _fused_vmem_bytes(n_pad, f_pads, fh_pad):
    """Conservative working-set estimate for the fused whole-encoder kernel."""
    widths = list(f_pads) + [fh_pad]
    max_f = max(widths)
    total = 2 * n_pad * n_pad            # A_hat (bf16, resident)
    total += 2 * n_pad * f_pads[0]       # X (bf16)
    total += 2 * n_pad * fh_pad          # output (bf16)
    for fi, fo in zip(widths[:-1], widths[1:]):
        total += 2 * fi * fo + 4 * fo    # weights (bf16) + biases (f32)
    total += 3 * 4 * n_pad * max_f       # f32 transform/aggregate temps
    return total


def variational_gcn_encoder(x, edge_index, params, out_channels, *,
                            force_tiled=False):
    """Forward pass: returns (mu, logstd)."""
    n, f_in = x.shape
    a_hat = normalized_adjacency(edge_index, n)

    f_dims = [f_in, params[0]["w"].shape[1],
              params[1]["w"].shape[1], params[2]["w"].shape[1]]
    f_pads = [_round_up(f, 128) for f in f_dims]
    fh = params[3]["w"].shape[1] + params[4]["w"].shape[1]
    fh_pad = _round_up(fh, 128)

    cap = _vmem_capacity_bytes()
    vmem_limit = _vmem_limit_bytes(cap)

    # mu / logstd share the input, so fuse their weights into one head matmul.
    w_head = jnp.concatenate([params[3]["w"], params[4]["w"]], axis=1)
    b_head = jnp.concatenate([params[3]["b"], params[4]["b"]], axis=0)

    # Lane-dense node padding (>= 128, multiple of 128).
    n_pad_fused = _round_up(max(n, 128), 128)
    use_fused = (
        not force_tiled
        and n_pad_fused <= 4096  # keep resident A <= ~32 MiB even on v7x
        and _fused_vmem_bytes(n_pad_fused, f_pads, fh_pad)
            <= vmem_limit - 4 * 1024 * 1024
    )

    if use_fused:
        n_pad = n_pad_fused
        a_pad = (jnp.zeros((n_pad, n_pad), jnp.bfloat16)
                 .at[:n, :n].set(a_hat.astype(jnp.bfloat16)))
        x_pad = (jnp.zeros((n_pad, f_pads[0]), jnp.bfloat16)
                 .at[:n, :f_in].set(x.astype(jnp.bfloat16)))
        w1p, b1p = _pad_wb(params[0]["w"], params[0]["b"], f_pads[0], f_pads[1])
        w2p, b2p = _pad_wb(params[1]["w"], params[1]["b"], f_pads[1], f_pads[2])
        w3p, b3p = _pad_wb(params[2]["w"], params[2]["b"], f_pads[2], f_pads[3])
        whp, bhp = _pad_wb(w_head, b_head, f_pads[3], fh_pad)

        out = pl.pallas_call(
            _fused_encoder_kernel,
            out_shape=jax.ShapeDtypeStruct((n_pad, fh_pad), jnp.bfloat16),
            compiler_params=pltpu.CompilerParams(vmem_limit_bytes=vmem_limit),
        )(a_pad, x_pad, w1p, b1p, w2p, b2p, w3p, b3p, whp, bhp)
    else:
        # Tiled per-layer fallback for graphs whose A_hat does not fit VMEM.
        if n <= 1024:
            n_pad = max(_round_up(n, 128), 128)
            tile_n = n_pad
        else:
            tile_n = _TILE_N
            n_pad = _round_up(n, tile_n)

        a_pad = (jnp.zeros((n_pad, n_pad), jnp.bfloat16)
                 .at[:n, :n].set(a_hat.astype(jnp.bfloat16)))
        h = (jnp.zeros((n_pad, f_pads[0]), jnp.bfloat16)
             .at[:n, :f_in].set(x.astype(jnp.bfloat16)))

        for i in range(3):
            h = gcn_conv(a_pad, h, params[i]["w"], params[i]["b"],
                         tile_n=tile_n, apply_relu=True,
                         out_dtype=jnp.bfloat16, vmem_limit=vmem_limit)
        out = gcn_conv(a_pad, h, w_head, b_head,
                       tile_n=tile_n, apply_relu=False,
                       out_dtype=jnp.bfloat16, vmem_limit=vmem_limit)

    out = out[:n].astype(jnp.float32)
    mu = out[:, :out_channels]
    logstd = out[:, out_channels:2 * out_channels]
    return mu, logstd


# ------------------------------ driver ---------------------------------------
if __name__ == "__main__":
    key = jax.random.PRNGKey(0)
    k_x, k_p = jax.random.split(key)

    num_nodes = 16
    in_channels = 8
    out_channels = 16

    x = jax.random.normal(k_x, (num_nodes, in_channels), jnp.float32)

    # Deterministic undirected ring graph (both edge directions listed).
    src = jnp.arange(num_nodes, dtype=jnp.int32)
    dst = (src + 1) % num_nodes
    edge_index = jnp.stack(
        [jnp.concatenate([src, dst]), jnp.concatenate([dst, src])], axis=0
    )  # [2, 2*num_nodes]

    params = init_params(k_p, in_channels, out_channels)

    # Pure-JAX f32 reference of the same math.  The kernels feed bf16 operands
    # to the MXU (with f32 accumulation) and store bf16, so compare loosely.
    a_hat = normalized_adjacency(edge_index, num_nodes)
    h_ref = x
    for i in range(3):
        h_ref = jnp.maximum(a_hat @ (h_ref @ params[i]["w"]) + params[i]["b"], 0.0)
    mu_ref = a_hat @ (h_ref @ params[3]["w"]) + params[3]["b"]
    logstd_ref = a_hat @ (h_ref @ params[4]["w"]) + params[4]["b"]

    # 1) Fused whole-encoder path (A_hat resident in VMEM, read once).
    mu, logstd = variational_gcn_encoder(x, edge_index, params, out_channels)
    jax.block_until_ready((mu, logstd))
    assert mu.shape == (num_nodes, out_channels)
    assert logstd.shape == (num_nodes, out_channels)
    assert jnp.allclose(mu, mu_ref, atol=5e-2, rtol=5e-2), float(
        jnp.max(jnp.abs(mu - mu_ref)))
    assert jnp.allclose(logstd, logstd_ref, atol=5e-2, rtol=5e-2), float(
        jnp.max(jnp.abs(logstd - logstd_ref)))

    # 2) Also exercise the tiled large-graph fallback path on the same input.
    mu_t, logstd_t = variational_gcn_encoder(
        x, edge_index, params, out_channels, force_tiled=True)
    jax.block_until_ready((mu_t, logstd_t))
    assert jnp.allclose(mu_t, mu_ref, atol=5e-2, rtol=5e-2), float(
        jnp.max(jnp.abs(mu_t - mu_ref)))
    assert jnp.allclose(logstd_t, logstd_ref, atol=5e-2, rtol=5e-2), float(
        jnp.max(jnp.abs(logstd_t - logstd_ref)))

    print("KERNEL_OK")
</pallas_src>

<mosaic_0001>
module attributes {stable_mosaic.version = 11 : i64} {
  func.func @_fused_encoder_kernel(%arg0: memref<128x128xbf16, #tpu.memory_space<vmem>>, %arg1: memref<128x128xbf16, #tpu.memory_space<vmem>>, %arg2: memref<128x128xbf16, #tpu.memory_space<vmem>>, %arg3: memref<1x128xf32, #tpu.memory_space<vmem>>, %arg4: memref<128x128xbf16, #tpu.memory_space<vmem>>, %arg5: memref<1x128xf32, #tpu.memory_space<vmem>>, %arg6: memref<128x128xbf16, #tpu.memory_space<vmem>>, %arg7: memref<1x128xf32, #tpu.memory_space<vmem>>, %arg8: memref<128x128xbf16, #tpu.memory_space<vmem>>, %arg9: memref<1x128xf32, #tpu.memory_space<vmem>>, %arg10: memref<128x128xbf16, #tpu.memory_space<vmem>>) attributes {dimension_semantics = [], scalar_prefetch = 0 : i64, scratch_operands = 0 : i64, tpu.core_type = #tpu.core_type<tc>} {
    %c0 = arith.constant 0 : index
    %c0_0 = arith.constant 0 : index
    %0 = vector.load %arg0[%c0, %c0_0] : memref<128x128xbf16, #tpu.memory_space<vmem>>, vector<128x128xbf16>
    %c0_1 = arith.constant 0 : index
    %c0_2 = arith.constant 0 : index
    %1 = vector.load %arg1[%c0_1, %c0_2] : memref<128x128xbf16, #tpu.memory_space<vmem>>, vector<128x128xbf16>
    %c0_3 = arith.constant 0 : index
    %c0_4 = arith.constant 0 : index
    %2 = vector.load %arg2[%c0_3, %c0_4] : memref<128x128xbf16, #tpu.memory_space<vmem>>, vector<128x128xbf16>
    %cst = arith.constant dense<0.000000e+00> : vector<128x128xf32>
    %3 = tpu.matmul %1, %2, %cst {dimension_numbers = #tpu.dot_dimension_numbers<[1], [0], [0], [1], [0, 0, 1, 1], [], []>} : vector<128x128xbf16>, vector<128x128xbf16>, vector<128x128xf32> -> vector<128x128xf32>
    %4 = arith.truncf %3 : vector<128x128xf32> to vector<128x128xbf16>
    %cst_5 = arith.constant dense<0.000000e+00> : vector<128x128xf32>
    %5 = tpu.matmul %0, %4, %cst_5 {dimension_numbers = #tpu.dot_dimension_numbers<[1], [0], [0], [1], [0, 0, 1, 1], [], []>} : vector<128x128xbf16>, vector<128x128xbf16>, vector<128x128xf32> -> vector<128x128xf32>
    %c0_6 = arith.constant 0 : index
    %c0_7 = arith.constant 0 : index
    %6 = vector.load %arg3[%c0_6, %c0_7] : memref<1x128xf32, #tpu.memory_space<vmem>>, vector<1x128xf32>
    %7 = vector.broadcast %6 : vector<1x128xf32> to vector<128x128xf32>
    %8 = arith.addf %5, %7 : vector<128x128xf32>
    %cst_8 = arith.constant 0.000000e+00 : f32
    %9 = vector.broadcast %cst_8 : f32 to vector<128x128xf32>
    %10 = arith.maximumf %8, %9 : vector<128x128xf32>
    %11 = arith.truncf %10 : vector<128x128xf32> to vector<128x128xbf16>
    %c0_9 = arith.constant 0 : index
    %c0_10 = arith.constant 0 : index
    %12 = vector.load %arg4[%c0_9, %c0_10] : memref<128x128xbf16, #tpu.memory_space<vmem>>, vector<128x128xbf16>
    %cst_11 = arith.constant dense<0.000000e+00> : vector<128x128xf32>
    %13 = tpu.matmul %11, %12, %cst_11 {dimension_numbers = #tpu.dot_dimension_numbers<[1], [0], [0], [1], [0, 0, 1, 1], [], []>} : vector<128x128xbf16>, vector<128x128xbf16>, vector<128x128xf32> -> vector<128x128xf32>
    %14 = arith.truncf %13 : vector<128x128xf32> to vector<128x128xbf16>
    %cst_12 = arith.constant dense<0.000000e+00> : vector<128x128xf32>
    %15 = tpu.matmul %0, %14, %cst_12 {dimension_numbers = #tpu.dot_dimension_numbers<[1], [0], [0], [1], [0, 0, 1, 1], [], []>} : vector<128x128xbf16>, vector<128x128xbf16>, vector<128x128xf32> -> vector<128x128xf32>
    %c0_13 = arith.constant 0 : index
    %c0_14 = arith.constant 0 : index
    %16 = vector.load %arg5[%c0_13, %c0_14] : memref<1x128xf32, #tpu.memory_space<vmem>>, vector<1x128xf32>
    %17 = vector.broadcast %16 : vector<1x128xf32> to vector<128x128xf32>
    %18 = arith.addf %15, %17 : vector<128x128xf32>
    %cst_15 = arith.constant 0.000000e+00 : f32
    %19 = vector.broadcast %cst_15 : f32 to vector<128x128xf32>
    %20 = arith.maximumf %18, %19 : vector<128x128xf32>
    %21 = arith.truncf %20 : vector<128x128xf32> to vector<128x128xbf16>
    %c0_16 = arith.constant 0 : index
    %c0_17 = arith.constant 0 : index
    %22 = vector.load %arg6[%c0_16, %c0_17] : memref<128x128xbf16, #tpu.memory_space<vmem>>, vector<128x128xbf16>
    %cst_18 = arith.constant dense<0.000000e+00> : vector<128x128xf32>
    %23 = tpu.matmul %21, %22, %cst_18 {dimension_numbers = #tpu.dot_dimension_numbers<[1], [0], [0], [1], [0, 0, 1, 1], [], []>} : vector<128x128xbf16>, vector<128x128xbf16>, vector<128x128xf32> -> vector<128x128xf32>
    %24 = arith.truncf %23 : vector<128x128xf32> to vector<128x128xbf16>
    %cst_19 = arith.constant dense<0.000000e+00> : vector<128x128xf32>
    %25 = tpu.matmul %0, %24, %cst_19 {dimension_numbers = #tpu.dot_dimension_numbers<[1], [0], [0], [1], [0, 0, 1, 1], [], []>} : vector<128x128xbf16>, vector<128x128xbf16>, vector<128x128xf32> -> vector<128x128xf32>
    %c0_20 = arith.constant 0 : index
    %c0_21 = arith.constant 0 : index
    %26 = vector.load %arg7[%c0_20, %c0_21] : memref<1x128xf32, #tpu.memory_space<vmem>>, vector<1x128xf32>
    %27 = vector.broadcast %26 : vector<1x128xf32> to vector<128x128xf32>
    %28 = arith.addf %25, %27 : vector<128x128xf32>
    %cst_22 = arith.constant 0.000000e+00 : f32
    %29 = vector.broadcast %cst_22 : f32 to vector<128x128xf32>
    %30 = arith.maximumf %28, %29 : vector<128x128xf32>
    %31 = arith.truncf %30 : vector<128x128xf32> to vector<128x128xbf16>
    %c0_23 = arith.constant 0 : index
    %c0_24 = arith.constant 0 : index
    %32 = vector.load %arg8[%c0_23, %c0_24] : memref<128x128xbf16, #tpu.memory_space<vmem>>, vector<128x128xbf16>
    %cst_25 = arith.constant dense<0.000000e+00> : vector<128x128xf32>
    %33 = tpu.matmul %31, %32, %cst_25 {dimension_numbers = #tpu.dot_dimension_numbers<[1], [0], [0], [1], [0, 0, 1, 1], [], []>} : vector<128x128xbf16>, vector<128x128xbf16>, vector<128x128xf32> -> vector<128x128xf32>
    %34 = arith.truncf %33 : vector<128x128xf32> to vector<128x128xbf16>
    %cst_26 = arith.constant dense<0.000000e+00> : vector<128x128xf32>
    %35 = tpu.matmul %0, %34, %cst_26 {dimension_numbers = #tpu.dot_dimension_numbers<[1], [0], [0], [1], [0, 0, 1, 1], [], []>} : vector<128x128xbf16>, vector<128x128xbf16>, vector<128x128xf32> -> vector<128x128xf32>
    %c0_27 = arith.constant 0 : index
    %c0_28 = arith.constant 0 : index
    %36 = vector.load %arg9[%c0_27, %c0_28] : memref<1x128xf32, #tpu.memory_space<vmem>>, vector<1x128xf32>
    %37 = vector.broadcast %36 : vector<1x128xf32> to vector<128x128xf32>
    %38 = arith.addf %35, %37 : vector<128x128xf32>
    %39 = arith.truncf %38 : vector<128x128xf32> to vector<128x128xbf16>
    %c0_29 = arith.constant 0 : index
    %c0_30 = arith.constant 0 : index
    %40 = vector.load %arg10[%c0_29, %c0_30] : memref<128x128xbf16, #tpu.memory_space<vmem>>, vector<128x128xbf16>
    tpu.vector_store %arg10[%c0_29, %c0_30], %39 {strides = array<i32>} : memref<128x128xbf16, #tpu.memory_space<vmem>>, vector<128x128xbf16>,
    return
  }
}

</mosaic_0001>

<llo_original>
// kernel: tpu_custom_call.1
$region0: #{tpu_custom_call.1}
  #allocation0 [shape = 'u32[]', space=smem, size = 0x4, offset = 0x4, fixed_abs, tag = 'smem constant byte address 0x4 - core index']
  #allocation1 [shape = 'u32[144,128]{1,0:T(1,128)}', space=vmem, size = 0x12000, scoped, tag = 'internal scratch']
  %s0 = inlined_call_operand.hbm [shape: bf16[128,128], index: 0, kind: input, shape index: {}]
  %s1 = inlined_call_operand.hbm [shape: bf16[128,128], index: 1, kind: input, shape index: {}]
  %s2 = inlined_call_operand.hbm [shape: bf16[128,128], index: 2, kind: input, shape index: {}]
  %s3 = inlined_call_operand.vmem [shape: f32[1,128], index: 3, kind: input, shape index: {}]
  %s4 = inlined_call_operand.hbm [shape: bf16[128,128], index: 4, kind: input, shape index: {}]
  %s5 = inlined_call_operand.vmem [shape: f32[1,128], index: 5, kind: input, shape index: {}]
  %s6 = inlined_call_operand.hbm [shape: bf16[128,128], index: 6, kind: input, shape index: {}]
  %s7 = inlined_call_operand.vmem [shape: f32[1,128], index: 7, kind: input, shape index: {}]
  %s8 = inlined_call_operand.hbm [shape: bf16[128,128], index: 8, kind: input, shape index: {}]
  %s9 = inlined_call_operand.vmem [shape: f32[1,128], index: 9, kind: input, shape index: {}]
  %s10 = inlined_call_operand.hbm [shape: bf16[128,128], index: 10, kind: output, shape index: {}]
  %s11 = sld [smem:[#allocation0]]
  $region74: #{tpu_custom_call.1} parent=0
    _
  %s13 = ssub.s32 1, %s11
  %s14 = scalar_select 0, %s13, %s11
  $region1: #{tpu_custom_call.1} parent=0
    #allocation2 [shape = 'u8[32768]{0}', space=vmem, size = 0x8000, scoped, tag = 'input window, operand 0, single buffered']
    #allocation3 [shape = 's32[1]{0}', space=sflag, size = 0x4, scoped, tag = 'scoped memory for tpu_custom_call.1']
    #allocation4 [shape = 's32[1]{0}', space=sflag, size = 0x4, scoped, tag = 'scoped memory for tpu_custom_call.1']
    #allocation5 [shape = 'u8[32768]{0}', space=vmem, size = 0x8000, scoped, tag = 'input window, operand 1, single buffered']
    #allocation6 [shape = 's32[1]{0}', space=sflag, size = 0x4, scoped, tag = 'scoped memory for tpu_custom_call.1']
    #allocation7 [shape = 'u8[32768]{0}', space=vmem, size = 0x8000, scoped, tag = 'input window, operand 2, single buffered']
    #allocation8 [shape = 'u8[32768]{0}', space=vmem, size = 0x8000, scoped, tag = 'input window, operand 4, single buffered']
    #allocation9 [shape = 's32[1]{0}', space=sflag, size = 0x4, scoped, tag = 'scoped memory for tpu_custom_call.1']
    #allocation10 [shape = 'u8[32768]{0}', space=vmem, size = 0x8000, scoped, tag = 'input window, operand 6, single buffered']
    #allocation11 [shape = 'u8[32768]{0}', space=vmem, size = 0x8000, scoped, tag = 'input window, operand 8, single buffered']
    #allocation12 [shape = 's32[1]{0}', space=sflag, size = 0x4, scoped, tag = 'scoped memory for tpu_custom_call.1']
    #allocation13 [shape = 'u8[32768]{0}', space=vmem, size = 0x8000, scoped, tag = 'output window, operand 0, single buffered']
    %15 = vsyncpa [#allocation3], 0
    %16 = vsyncpa [#allocation6], 0
    %17 = vsyncpa [#allocation9], 0
    %18 = vsyncpa [#allocation12], 0
    %19 = vsyncpa [#allocation4], 0
    // Predicated region
    $region2: #{tpu_custom_call.1} parent=1 // pred_check
      _
    $region3: #{tpu_custom_call.1} parent=1 // pred_check_branch
      %21 = sbr.rel (0) target = $region5
    $region4: #{tpu_custom_call.1} parent=1 // pred_region
      %s23 = ssub.s32 1024, 1024
      %24 = vsyncadd [#allocation3], %s23
      %s25 = sshll.u32 [#allocation2], 4
      %s26 = int_to_ptr.vmem [resolvable:$true] %s25
      %31 = dma.hbm_to_vmem [thread:$0]  %s0, 1024, %s26, [#allocation3], 64, 64, 4
    $region5: #{tpu_custom_call.1} parent=1 // pred_fallthru
      _
    // Predicated region
    $region6: #{tpu_custom_call.1} parent=1 // pred_check
      _
    $region7: #{tpu_custom_call.1} parent=1 // pred_check_branch
      %33 = sbr.rel (0) target = $region9
    $region8: #{tpu_custom_call.1} parent=1 // pred_region
      %s35 = ssub.s32 1024, 1024
      %36 = vsyncadd [#allocation6], %s35
      %s37 = sshll.u32 [#allocation5], 4
      %s38 = int_to_ptr.vmem [resolvable:$true] %s37
      %43 = dma.hbm_to_vmem [thread:$0]  %s1, 1024, %s38, [#allocation6], 64, 64, 4
    $region9: #{tpu_custom_call.1} parent=1 // pred_fallthru
      _
    // Predicated region
    $region10: #{tpu_custom_call.1} parent=1 // pred_check
      _
    $region11: #{tpu_custom_call.1} parent=1 // pred_check_branch
      %45 = sbr.rel (0) target = $region13
    $region12: #{tpu_custom_call.1} parent=1 // pred_region
      %s47 = ssub.s32 1024, 1024
      %48 = vsyncadd [#allocation6], %s47
      %s49 = sshll.u32 [#allocation7], 4
      %s50 = int_to_ptr.vmem [resolvable:$true] %s49
      %55 = dma.hbm_to_vmem [thread:$0]  %s2, 1024, %s50, [#allocation6], 64, 64, 4
    $region13: #{tpu_custom_call.1} parent=1 // pred_fallthru
      _
    // Predicated region
    $region14: #{tpu_custom_call.1} parent=1 // pred_check
      _
    $region15: #{tpu_custom_call.1} parent=1 // pred_check_branch
      %57 = sbr.rel (0) target = $region17
    $region16: #{tpu_custom_call.1} parent=1 // pred_region
      _
    $region17: #{tpu_custom_call.1} parent=1 // pred_fallthru
      _
    // Predicated region
    $region18: #{tpu_custom_call.1} parent=1 // pred_check
      _
    $region19: #{tpu_custom_call.1} parent=1 // pred_check_branch
      %59 = sbr.rel (0) target = $region21
    $region20: #{tpu_custom_call.1} parent=1 // pred_region
      %s61 = ssub.s32 1024, 1024
      %62 = vsyncadd [#allocation9], %s61
      %s63 = sshll.u32 [#allocation8], 4
      %s64 = int_to_ptr.vmem [resolvable:$true] %s63
      %69 = dma.hbm_to_vmem [thread:$0]  %s4, 1024, %s64, [#allocation9], 64, 64, 4
    $region21: #{tpu_custom_call.1} parent=1 // pred_fallthru
      _
    // Predicated region
    $region22: #{tpu_custom_call.1} parent=1 // pred_check
      _
    $region23: #{tpu_custom_call.1} parent=1 // pred_check_branch
      %71 = sbr.rel (0) target = $region25
    $region24: #{tpu_custom_call.1} parent=1 // pred_region
      _
    $region25: #{tpu_custom_call.1} parent=1 // pred_fallthru
      _
    // Predicated region
    $region26: #{tpu_custom_call.1} parent=1 // pred_check
      _
    $region27: #{tpu_custom_call.1} parent=1 // pred_check_branch
      %73 = sbr.rel (0) target = $region29
    $region28: #{tpu_custom_call.1} parent=1 // pred_region
      %s75 = ssub.s32 1024, 1024
      %76 = vsyncadd [#allocation9], %s75
      %s77 = sshll.u32 [#allocation10], 4
      %s78 = int_to_ptr.vmem [resolvable:$true] %s77
      %83 = dma.hbm_to_vmem [thread:$0]  %s6, 1024, %s78, [#allocation9], 64, 64, 4
    $region29: #{tpu_custom_call.1} parent=1 // pred_fallthru
      _
    // Predicated region
    $region30: #{tpu_custom_call.1} parent=1 // pred_check
      _
    $region31: #{tpu_custom_call.1} parent=1 // pred_check_branch
      %85 = sbr.rel (0) target = $region33
    $region32: #{tpu_custom_call.1} parent=1 // pred_region
      _
    $region33: #{tpu_custom_call.1} parent=1 // pred_fallthru
      _
    // Predicated region
    $region34: #{tpu_custom_call.1} parent=1 // pred_check
      _
    $region35: #{tpu_custom_call.1} parent=1 // pred_check_branch
      %87 = sbr.rel (0) target = $region37
    $region36: #{tpu_custom_call.1} parent=1 // pred_region
      %s89 = ssub.s32 1024, 1024
      %90 = vsyncadd [#allocation12], %s89
      %s91 = sshll.u32 [#allocation11], 4
      %s92 = int_to_ptr.vmem [resolvable:$true] %s91
      %97 = dma.hbm_to_vmem [thread:$0]  %s8, 1024, %s92, [#allocation12], 64, 64, 4
    $region37: #{tpu_custom_call.1} parent=1 // pred_fallthru
      _
    // Predicated region
    $region38: #{tpu_custom_call.1} parent=1 // pred_check
      _
    $region39: #{tpu_custom_call.1} parent=1 // pred_check_branch
      %99 = sbr.rel (0) target = $region41
    $region40: #{tpu_custom_call.1} parent=1 // pred_region
      _
    $region41: #{tpu_custom_call.1} parent=1 // pred_fallthru
      _
    // Predicated region
    $region42: #{tpu_custom_call.1} parent=1 // pred_check
      _
    $region43: #{tpu_custom_call.1} parent=1 // pred_check_branch
      %101 = sbr.rel (0) target = $region45
    $region44: #{tpu_custom_call.1} parent=1 // pred_region
      %102 = dma.done [#allocation3], 1024
    $region45: #{tpu_custom_call.1} parent=1 // pred_fallthru
      _
    // Predicated region
    $region46: #{tpu_custom_call.1} parent=1 // pred_check
      _
    $region47: #{tpu_custom_call.1} parent=1 // pred_check_branch
      %104 = sbr.rel (0) target = $region49
    $region48: #{tpu_custom_call.1} parent=1 // pred_region
      %105 = dma.done [#allocation6], 1024
    $region49: #{tpu_custom_call.1} parent=1 // pred_fallthru
      _
    // Predicated region
    $region50: #{tpu_custom_call.1} parent=1 // pred_check
      _
    $region51: #{tpu_custom_call.1} parent=1 // pred_check_branch
      %107 = sbr.rel (0) target = $region53
    $region52: #{tpu_custom_call.1} parent=1 // pred_region
      %108 = dma.done [#allocation6], 1024
    $region53: #{tpu_custom_call.1} parent=1 // pred_fallthru
      _
    // Predicated region
    $region54: #{tpu_custom_call.1} parent=1 // pred_check
      _
    $region55: #{tpu_custom_call.1} parent=1 // pred_check_branch
      %110 = sbr.rel (0) target = $region57
    $region56: #{tpu_custom_call.1} parent=1 // pred_region
      %111 = dma.done [#allocation9], 1024
    $region57: #{tpu_custom_call.1} parent=1 // pred_fallthru
      _
    // Predicated region
    $region58: #{tpu_custom_call.1} parent=1 // pred_check
      _
    $region59: #{tpu_custom_call.1} parent=1 // pred_check_branch
      %113 = sbr.rel (0) target = $region61
    $region60: #{tpu_custom_call.1} parent=1 // pred_region
      %114 = dma.done [#allocation9], 1024
    $region61: #{tpu_custom_call.1} parent=1 // pred_fallthru
      _
    // Predicated region
    $region62: #{tpu_custom_call.1} parent=1 // pred_check
      _
    $region63: #{tpu_custom_call.1} parent=1 // pred_check_branch
      %116 = sbr.rel (0) target = $region65
    $region64: #{tpu_custom_call.1} parent=1 // pred_region
      %117 = dma.done [#allocation12], 1024
    $region65: #{tpu_custom_call.1} parent=1 // pred_fallthru
      _
    %v119 = vld [vmem:[#allocation2] sm:$0xf]
    %v120 = vld [vmem:[#allocation2 + $0x4] sm:$0xf]
    %v121 = vld [vmem:[#allocation2 + $0x8] sm:$0xf]
    %v122 = vld [vmem:[#allocation2 + $0xc] sm:$0xf]
    %v123 = vld [vmem:[#allocation2 + $0x10] sm:$0xf]
    %v124 = vld [vmem:[#allocation2 + $0x14] sm:$0xf]
    %v125 = vld [vmem:[#allocation2 + $0x18] sm:$0xf]
    %v126 = vld [vmem:[#allocation2 + $0x1c] sm:$0xf]
    %v127 = vld [vmem:[#allocation2 + $0x20] sm:$0xf]
    %v128 = vld [vmem:[#allocation2 + $0x24] sm:$0xf]
    %v129 = vld [vmem:[#allocation2 + $0x28] sm:$0xf]
    %v130 = vld [vmem:[#allocation2 + $0x2c] sm:$0xf]
    %v131 = vld [vmem:[#allocation2 + $0x30] sm:$0xf]
    %v132 = vld [vmem:[#allocation2 + $0x34] sm:$0xf]
    %v133 = vld [vmem:[#allocation2 + $0x38] sm:$0xf]
    %v134 = vld [vmem:[#allocation2 + $0x3c] sm:$0xf]
    %v135 = vld [vmem:[#allocation5] sm:$0xf]
    %v136 = vld [vmem:[#allocation5 + $0x4] sm:$0xf]
    %v137 = vld [vmem:[#allocation5 + $0x8] sm:$0xf]
    %v138 = vld [vmem:[#allocation5 + $0xc] sm:$0xf]
    %v139 = vld [vmem:[#allocation5 + $0x10] sm:$0xf]
    %v140 = vld [vmem:[#allocation5 + $0x14] sm:$0xf]
    %v141 = vld [vmem:[#allocation5 + $0x18] sm:$0xf]
    %v142 = vld [vmem:[#allocation5 + $0x1c] sm:$0xf]
    %v143 = vld [vmem:[#allocation5 + $0x20] sm:$0xf]
    %v144 = vld [vmem:[#allocation5 + $0x24] sm:$0xf]
    %v145 = vld [vmem:[#allocation5 + $0x28] sm:$0xf]
    %v146 = vld [vmem:[#allocation5 + $0x2c] sm:$0xf]
    %v147 = vld [vmem:[#allocation5 + $0x30] sm:$0xf]
    %v148 = vld [vmem:[#allocation5 + $0x34] sm:$0xf]
    %v149 = vld [vmem:[#allocation5 + $0x38] sm:$0xf]
    %v150 = vld [vmem:[#allocation5 + $0x3c] sm:$0xf]
    %v151 = vld [vmem:[#allocation7] sm:$0xf]
    %v152 = vld [vmem:[#allocation7 + $0x4] sm:$0xf]
    %v153 = vld [vmem:[#allocation7 + $0x8] sm:$0xf]
    %v154 = vld [vmem:[#allocation7 + $0xc] sm:$0xf]
    %v155 = vld [vmem:[#allocation7 + $0x10] sm:$0xf]
    %v156 = vld [vmem:[#allocation7 + $0x14] sm:$0xf]
    %v157 = vld [vmem:[#allocation7 + $0x18] sm:$0xf]
    %v158 = vld [vmem:[#allocation7 + $0x1c] sm:$0xf]
    %v159 = vld [vmem:[#allocation7 + $0x20] sm:$0xf]
    %v160 = vld [vmem:[#allocation7 + $0x24] sm:$0xf]
    %v161 = vld [vmem:[#allocation7 + $0x28] sm:$0xf]
    %v162 = vld [vmem:[#allocation7 + $0x2c] sm:$0xf]
    %v163 = vld [vmem:[#allocation7 + $0x30] sm:$0xf]
    %v164 = vld [vmem:[#allocation7 + $0x34] sm:$0xf]
    %v165 = vld [vmem:[#allocation7 + $0x38] sm:$0xf]
    %v166 = vld [vmem:[#allocation7 + $0x3c] sm:$0xf]
    %v183 = vunpack.c.l.b16 %v135
    %v184 = vunpack.c.l.b16 %v136
    %v185 = vunpack.c.l.b16 %v137
    %v186 = vunpack.c.l.b16 %v138
    %v187 = vunpack.c.l.b16 %v139
    %v188 = vunpack.c.l.b16 %v140
    %v189 = vunpack.c.l.b16 %v141
    %v190 = vunpack.c.l.b16 %v142
    %v191 = vunpack.c.l.b16 %v143
    %v192 = vunpack.c.l.b16 %v144
    %v193 = vunpack.c.l.b16 %v145
    %v194 = vunpack.c.l.b16 %v146
    %v195 = vunpack.c.l.b16 %v147
    %v196 = vunpack.c.l.b16 %v148
    %v197 = vunpack.c.l.b16 %v149
    %v198 = vunpack.c.l.b16 %v150
    %v199 = vpack.c.b16 %v184, %v183
    %v200 = vpack.c.b16 %v186, %v185
    %v201 = vpack.c.b16 %v188, %v187
    %v202 = vpack.c.b16 %v190, %v189
    %v203 = vpack.c.b16 %v192, %v191
    %v204 = vpack.c.b16 %v194, %v193
    %v205 = vpack.c.b16 %v196, %v195
    %v206 = vpack.c.b16 %v198, %v197
    %v231 = vunpack.c.l.b16 %v151
    %v232 = vunpack.c.l.b16 %v152
    %v233 = vunpack.c.l.b16 %v153
    %v234 = vunpack.c.l.b16 %v154
    %v235 = vunpack.c.l.b16 %v155
    %v236 = vunpack.c.l.b16 %v156
    %v237 = vunpack.c.l.b16 %v157
    %v238 = vunpack.c.l.b16 %v158
    %v239 = vunpack.c.l.b16 %v159
    %v240 = vunpack.c.l.b16 %v160
    %v241 = vunpack.c.l.b16 %v161
    %v242 = vunpack.c.l.b16 %v162
    %v243 = vunpack.c.l.b16 %v163
    %v244 = vunpack.c.l.b16 %v164
    %v245 = vunpack.c.l.b16 %v165
    %v246 = vunpack.c.l.b16 %v166
    %v247 = vpack.c.b16 %v232, %v231
    %v248 = vpack.c.b16 %v234, %v233
    %v249 = vpack.c.b16 %v236, %v235
    %v250 = vpack.c.b16 %v238, %v237
    %v251 = vpack.c.b16 %v240, %v239
    %v252 = vpack.c.b16 %v242, %v241
    %v253 = vpack.c.b16 %v244, %v243
    %v254 = vpack.c.b16 %v246, %v245
    %263 = vmatprep.subr.bf16.mxu0 0
    %264 = vmatpush1.bf16.msra.mxu0 %v247
    %265 = vmatprep.subr.bf16.mxu0 0
    %266 = vmatpush1.bf16.msra.mxu0 %v248
    %267 = vmatprep.subr.bf16.mxu0 0
    %268 = vmatpush1.bf16.msra.mxu0 %v249
    %269 = vmatprep.subr.bf16.mxu0 0
    %270 = vmatpush1.bf16.msra.mxu0 %v250
    %271 = vmatprep.subr.bf16.mxu0 0
    %272 = vmatpush1.bf16.msra.mxu0 %v251
    %273 = vmatprep.subr.bf16.mxu0 0
    %274 = vmatpush1.bf16.msra.mxu0 %v252
    %275 = vmatprep.subr.bf16.mxu0 0
    %276 = vmatpush1.bf16.msra.mxu0 %v253
    %277 = vmatprep.subr.bf16.mxu0 0
    %278 = vmatpush1.bf16.msra.mxu0 %v254
    %279 = vmatprep.subr.bf16.mxu0 0
    %280 = vmatpush1.bf16.msra.mxu0 0
    %281 = vmatprep.subr.bf16.mxu0 0
    %282 = vmatpush1.bf16.msra.mxu0 0
    %283 = vmatprep.subr.bf16.mxu0 0
    %284 = vmatpush1.bf16.msra.mxu0 0
    %285 = vmatprep.subr.bf16.mxu0 0
    %286 = vmatpush1.bf16.msra.mxu0 0
    %287 = vmatprep.subr.bf16.mxu0 0
    %288 = vmatpush1.bf16.msra.mxu0 0
    %289 = vmatprep.subr.bf16.mxu0 0
    %290 = vmatpush1.bf16.msra.mxu0 0
    %291 = vmatprep.subr.bf16.mxu0 0
    %292 = vmatpush1.bf16.msra.mxu0 0
    %293 = vmatprep.subr.bf16.mxu0 0
    %294 = vmatpush1.bf16.msra.mxu0 0
    %295 = vmatprep.mubr.bf16.mxu0 0
    %296 = vmatmul.mubr.bf16.gmra.mrb[0].mxu0 %v199
    %v297 = vpop.f32.mrb[0].mxu0
    %v298 = vadd.f32 0.0, %v297
    %v299 = vpop.f32.mrb[0].mxu0
    %v300 = vpop.f32.mrb[0].mxu0
    %v301 = vadd.f32 0.0, %v300
    %v302 = vpop.f32.mrb[0].mxu0
    %303 = vmatprep.mubr.bf16.mxu0 0
    %304 = vmatmul.mubr.bf16.gmra.mrb[0].mxu0 %v200
    %v305 = vpop.f32.mrb[0].mxu0
    %v306 = vadd.f32 0.0, %v305
    %v307 = vpop.f32.mrb[0].mxu0
    %v308 = vpop.f32.mrb[0].mxu0
    %v309 = vadd.f32 0.0, %v308
    %v310 = vpop.f32.mrb[0].mxu0
    %311 = vmatprep.mubr.bf16.mxu0 0
    %312 = vmatmul.mubr.bf16.gmra.mrb[0].mxu0 %v201
    %v313 = vpop.f32.mrb[0].mxu0
    %v314 = vadd.f32 0.0, %v313
    %v315 = vpop.f32.mrb[0].mxu0
    %v316 = vpop.f32.mrb[0].mxu0
    %v317 = vadd.f32 0.0, %v316
    %v318 = vpop.f32.mrb[0].mxu0
    %319 = vmatprep.mubr.bf16.mxu0 0
    %320 = vmatmul.mubr.bf16.gmra.mrb[0].mxu0 %v202
    %v321 = vpop.f32.mrb[0].mxu0
    %v322 = vadd.f32 0.0, %v321
    %v323 = vpop.f32.mrb[0].mxu0
    %v324 = vpop.f32.mrb[0].mxu0
    %v325 = vadd.f32 0.0, %v324
    %v326 = vpop.f32.mrb[0].mxu0
    %327 = vmatprep.mubr.bf16.mxu0 0
    %328 = vmatmul.mubr.bf16.gmra.mrb[0].mxu0 %v203
    %v329 = vpop.f32.mrb[0].mxu0
    %v330 = vadd.f32 0.0, %v329
    %v331 = vpop.f32.mrb[0].mxu0
    %v332 = vpop.f32.mrb[0].mxu0
    %v333 = vadd.f32 0.0, %v332
    %v334 = vpop.f32.mrb[0].mxu0
    %335 = vmatprep.mubr.bf16.mxu0 0
    %336 = vmatmul.mubr.bf16.gmra.mrb[0].mxu0 %v204
    %v337 = vpop.f32.mrb[0].mxu0
    %v338 = vadd.f32 0.0, %v337
    %v339 = vpop.f32.mrb[0].mxu0
    %v340 = vpop.f32.mrb[0].mxu0
    %v341 = vadd.f32 0.0, %v340
    %v342 = vpop.f32.mrb[0].mxu0
    %343 = vmatprep.mubr.bf16.mxu0 0
    %344 = vmatmul.mubr.bf16.gmra.mrb[0].mxu0 %v205
    %v345 = vpop.f32.mrb[0].mxu0
    %v346 = vadd.f32 0.0, %v345
    %v347 = vpop.f32.mrb[0].mxu0
    %v348 = vpop.f32.mrb[0].mxu0
    %v349 = vadd.f32 0.0, %v348
    %v350 = vpop.f32.mrb[0].mxu0
    %351 = vmatprep.mubr.bf16.mxu0 0
    %352 = vmatmul.mubr.bf16.gmra.mrb[0].mxu0 %v206
    %v353 = vpop.f32.mrb[0].mxu0
    %v354 = vadd.f32 0.0, %v353
    %v355 = vpop.f32.mrb[0].mxu0
    %v356 = vpop.f32.mrb[0].mxu0
    %v357 = vadd.f32 0.0, %v356
    %v358 = vpop.f32.mrb[0].mxu0
    %359 = vdwg.mxu0
    %v360 = vpack.c.bf16 %v301, %v298
    %v361 = vpack.c.bf16 %v309, %v306
    %v362 = vpack.c.bf16 %v317, %v314
    %v363 = vpack.c.bf16 %v325, %v322
    %v364 = vpack.c.bf16 %v333, %v330
    %v365 = vpack.c.bf16 %v341, %v338
    %v366 = vpack.c.bf16 %v349, %v346
    %v367 = vpack.c.bf16 %v357, %v354
    %v368 = vld [vmem:[%s3] sm:$0x1]
    %v370 = vlaneseq
    %v371 = vshrl.u32 %v370, 7
    %v372 = vsub.s32 0, %v371
    %v373 = vrot.slane %v368, %v372
    %v391 = vunpack.c.l.b16 %v119
    %v392 = vunpack.c.l.b16 %v120
    %v393 = vunpack.c.l.b16 %v121
    %v394 = vunpack.c.l.b16 %v122
    %v395 = vunpack.c.l.b16 %v123
    %v396 = vunpack.c.l.b16 %v124
    %v397 = vunpack.c.l.b16 %v125
    %v398 = vunpack.c.l.b16 %v126
    %v399 = vunpack.c.l.b16 %v127
    %v400 = vunpack.c.l.b16 %v128
    %v401 = vunpack.c.l.b16 %v129
    %v402 = vunpack.c.l.b16 %v130
    %v403 = vunpack.c.l.b16 %v131
    %v404 = vunpack.c.l.b16 %v132
    %v405 = vunpack.c.l.b16 %v133
    %v406 = vunpack.c.l.b16 %v134
    %v407 = vpack.c.b16 %v392, %v391
    %v408 = vpack.c.b16 %v394, %v393
    %v409 = vpack.c.b16 %v396, %v395
    %v410 = vpack.c.b16 %v398, %v397
    %v411 = vpack.c.b16 %v400, %v399
    %v412 = vpack.c.b16 %v402, %v401
    %v413 = vpack.c.b16 %v404, %v403
    %v414 = vpack.c.b16 %v406, %v405
    %423 = vmatprep.subr.bf16.mxu0 0
    %424 = vmatpush1.bf16.msra.mxu0 %v360
    %425 = vmatprep.subr.bf16.mxu0 0
    %426 = vmatpush1.bf16.msra.mxu0 %v361
    %427 = vmatprep.subr.bf16.mxu0 0
    %428 = vmatpush1.bf16.msra.mxu0 %v362
    %429 = vmatprep.subr.bf16.mxu0 0
    %430 = vmatpush1.bf16.msra.mxu0 %v363
    %431 = vmatprep.subr.bf16.mxu0 0
    %432 = vmatpush1.bf16.msra.mxu0 %v364
    %433 = vmatprep.subr.bf16.mxu0 0
    %434 = vmatpush1.bf16.msra.mxu0 %v365
    %435 = vmatprep.subr.bf16.mxu0 0
    %436 = vmatpush1.bf16.msra.mxu0 %v366
    %437 = vmatprep.subr.bf16.mxu0 0
    %438 = vmatpush1.bf16.msra.mxu0 %v367
    %439 = vmatprep.subr.bf16.mxu0 0
    %440 = vmatpush1.bf16.msra.mxu0 0
    %441 = vmatprep.subr.bf16.mxu0 0
    %442 = vmatpush1.bf16.msra.mxu0 0
    %443 = vmatprep.subr.bf16.mxu0 0
    %444 = vmatpush1.bf16.msra.mxu0 0
    %445 = vmatprep.subr.bf16.mxu0 0
    %446 = vmatpush1.bf16.msra.mxu0 0
    %447 = vmatprep.subr.bf16.mxu0 0
    %448 = vmatpush1.bf16.msra.mxu0 0
    %449 = vmatprep.subr.bf16.mxu0 0
    %450 = vmatpush1.bf16.msra.mxu0 0
    %451 = vmatprep.subr.bf16.mxu0 0
    %452 = vmatpush1.bf16.msra.mxu0 0
    %453 = vmatprep.subr.bf16.mxu0 0
    %454 = vmatpush1.bf16.msra.mxu0 0
    %455 = vmatprep.mubr.bf16.mxu0 0
    %456 = vmatmul.mubr.bf16.gmra.mrb[0].mxu0 %v407
    %v457 = vpop.f32.mrb[0].mxu0
    %v458 = vadd.f32 %v373, %v457
    %v459 = vpop.f32.mrb[0].mxu0
    %v460 = vpop.f32.mrb[0].mxu0
    %v461 = vadd.f32 %v373, %v460
    %v462 = vpop.f32.mrb[0].mxu0
    %463 = vmatprep.mubr.bf16.mxu0 0
    %464 = vmatmul.mubr.bf16.gmra.mrb[0].mxu0 %v408
    %v465 = vpop.f32.mrb[0].mxu0
    %v466 = vadd.f32 %v373, %v465
    %v467 = vpop.f32.mrb[0].mxu0
    %v468 = vpop.f32.mrb[0].mxu0
    %v469 = vadd.f32 %v373, %v468
    %v470 = vpop.f32.mrb[0].mxu0
    %471 = vmatprep.mubr.bf16.mxu0 0
    %472 = vmatmul.mubr.bf16.gmra.mrb[0].mxu0 %v409
    %v473 = vpop.f32.mrb[0].mxu0
    %v474 = vadd.f32 %v373, %v473
    %v475 = vpop.f32.mrb[0].mxu0
    %v476 = vpop.f32.mrb[0].mxu0
    %v477 = vadd.f32 %v373, %v476
    %v478 = vpop.f32.mrb[0].mxu0
    %479 = vmatprep.mubr.bf16.mxu0 0
    %480 = vmatmul.mubr.bf16.gmra.mrb[0].mxu0 %v410
    %v481 = vpop.f32.mrb[0].mxu0
    %v482 = vadd.f32 %v373, %v481
    %v483 = vpop.f32.mrb[0].mxu0
    %v484 = vpop.f32.mrb[0].mxu0
    %v485 = vadd.f32 %v373, %v484
    %v486 = vpop.f32.mrb[0].mxu0
    %487 = vmatprep.mubr.bf16.mxu0 0
    %488 = vmatmul.mubr.bf16.gmra.mrb[0].mxu0 %v411
    %v489 = vpop.f32.mrb[0].mxu0
    %v490 = vadd.f32 %v373, %v489
    %v491 = vpop.f32.mrb[0].mxu0
    %v492 = vpop.f32.mrb[0].mxu0
    %v493 = vadd.f32 %v373, %v492
    %v494 = vpop.f32.mrb[0].mxu0
    %495 = vmatprep.mubr.bf16.mxu0 0
    %496 = vmatmul.mubr.bf16.gmra.mrb[0].mxu0 %v412
    %v497 = vpop.f32.mrb[0].mxu0
    %v498 = vadd.f32 %v373, %v497
    %v499 = vpop.f32.mrb[0].mxu0
    %v500 = vpop.f32.mrb[0].mxu0
    %v501 = vadd.f32 %v373, %v500
    %v502 = vpop.f32.mrb[0].mxu0
    %503 = vmatprep.mubr.bf16.mxu0 0
    %504 = vmatmul.mubr.bf16.gmra.mrb[0].mxu0 %v413
    %v505 = vpop.f32.mrb[0].mxu0
    %v506 = vadd.f32 %v373, %v505
    %v507 = vpop.f32.mrb[0].mxu0
    %v508 = vpop.f32.mrb[0].mxu0
    %v509 = vadd.f32 %v373, %v508
    %v510 = vpop.f32.mrb[0].mxu0
    %511 = vmatprep.mubr.bf16.mxu0 0
    %512 = vmatmul.mubr.bf16.gmra.mrb[0].mxu0 %v414
    %v513 = vpop.f32.mrb[0].mxu0
    %v514 = vadd.f32 %v373, %v513
    %v515 = vpop.f32.mrb[0].mxu0
    %v516 = vpop.f32.mrb[0].mxu0
    %v517 = vadd.f32 %v373, %v516
    %v518 = vpop.f32.mrb[0].mxu0
    %519 = vdwg.mxu0
    %v520 = vmax.f32 %v458, 0.0
    %v521 = vmax.f32 %v461, 0.0
    %v522 = vmax.f32 %v466, 0.0
    %v523 = vmax.f32 %v469, 0.0
    %v524 = vmax.f32 %v474, 0.0
    %v525 = vmax.f32 %v477, 0.0
    %v526 = vmax.f32 %v482, 0.0
    %v527 = vmax.f32 %v485, 0.0
    %v528 = vmax.f32 %v490, 0.0
    %v529 = vmax.f32 %v493, 0.0
    %v530 = vmax.f32 %v498, 0.0
    %v531 = vmax.f32 %v501, 0.0
    %v532 = vmax.f32 %v506, 0.0
    %v533 = vmax.f32 %v509, 0.0
    %v534 = vmax.f32 %v514, 0.0
    %v535 = vmax.f32 %v517, 0.0
    %v536 = vpack.c.bf16 %v521, %v520
    %v537 = vpack.c.bf16 %v523, %v522
    %v538 = vpack.c.bf16 %v525, %v524
    %v539 = vpack.c.bf16 %v527, %v526
    %v540 = vpack.c.bf16 %v529, %v528
    %v541 = vpack.c.bf16 %v531, %v530
    %v542 = vpack.c.bf16 %v533, %v532
    %v543 = vpack.c.bf16 %v535, %v534
    %v544 = vld [vmem:[#allocation8] sm:$0xf]
    %v545 = vld [vmem:[#allocation8 + $0x4] sm:$0xf]
    %v546 = vld [vmem:[#allocation8 + $0x8] sm:$0xf]
    %v547 = vld [vmem:[#allocation8 + $0xc] sm:$0xf]
    %v548 = vld [vmem:[#allocation8 + $0x10] sm:$0xf]
    %v549 = vld [vmem:[#allocation8 + $0x14] sm:$0xf]
    %v550 = vld [vmem:[#allocation8 + $0x18] sm:$0xf]
    %v551 = vld [vmem:[#allocation8 + $0x1c] sm:$0xf]
    %v552 = vld [vmem:[#allocation8 + $0x20] sm:$0xf]
    %v553 = vld [vmem:[#allocation8 + $0x24] sm:$0xf]
    %v554 = vld [vmem:[#allocation8 + $0x28] sm:$0xf]
    %v555 = vld [vmem:[#allocation8 + $0x2c] sm:$0xf]
    %v556 = vld [vmem:[#allocation8 + $0x30] sm:$0xf]
    %v557 = vld [vmem:[#allocation8 + $0x34] sm:$0xf]
    %v558 = vld [vmem:[#allocation8 + $0x38] sm:$0xf]
    %v559 = vld [vmem:[#allocation8 + $0x3c] sm:$0xf]
    %v576 = vunpack.c.l.b16 %v544
    %v577 = vunpack.c.l.b16 %v545
    %v578 = vunpack.c.l.b16 %v546
    %v579 = vunpack.c.l.b16 %v547
    %v580 = vunpack.c.l.b16 %v548
    %v581 = vunpack.c.l.b16 %v549
    %v582 = vunpack.c.l.b16 %v550
    %v583 = vunpack.c.l.b16 %v551
    %v584 = vunpack.c.l.b16 %v552
    %v585 = vunpack.c.l.b16 %v553
    %v586 = vunpack.c.l.b16 %v554
    %v587 = vunpack.c.l.b16 %v555
    %v588 = vunpack.c.l.b16 %v556
    %v589 = vunpack.c.l.b16 %v557
    %v590 = vunpack.c.l.b16 %v558
    %v591 = vunpack.c.l.b16 %v559
    %v592 = vpack.c.b16 %v577, %v576
    %v593 = vpack.c.b16 %v579, %v578
    %v594 = vpack.c.b16 %v581, %v580
    %v595 = vpack.c.b16 %v583, %v582
    %v596 = vpack.c.b16 %v585, %v584
    %v597 = vpack.c.b16 %v587, %v586
    %v598 = vpack.c.b16 %v589, %v588
    %v599 = vpack.c.b16 %v591, %v590
    %608 = vmatprep.subr.bf16.mxu0 0
    %609 = vmatpush1.bf16.msra.mxu0 %v592
    %610 = vmatprep.subr.bf16.mxu0 0
    %611 = vmatpush1.bf16.msra.mxu0 %v593
    %612 = vmatprep.subr.bf16.mxu0 0
    %613 = vmatpush1.bf16.msra.mxu0 %v594
    %614 = vmatprep.subr.bf16.mxu0 0
    %615 = vmatpush1.bf16.msra.mxu0 %v595
    %616 = vmatprep.subr.bf16.mxu0 0
    %617 = vmatpush1.bf16.msra.mxu0 %v596
    %618 = vmatprep.subr.bf16.mxu0 0
    %619 = vmatpush1.bf16.msra.mxu0 %v597
    %620 = vmatprep.subr.bf16.mxu0 0
    %621 = vmatpush1.bf16.msra.mxu0 %v598
    %622 = vmatprep.subr.bf16.mxu0 0
    %623 = vmatpush1.bf16.msra.mxu0 %v599
    %624 = vmatprep.subr.bf16.mxu0 0
    %625 = vmatpush1.bf16.msra.mxu0 0
    %626 = vmatprep.subr.bf16.mxu0 0
    %627 = vmatpush1.bf16.msra.mxu0 0
    %628 = vmatprep.subr.bf16.mxu0 0
    %629 = vmatpush1.bf16.msra.mxu0 0
    %630 = vmatprep.subr.bf16.mxu0 0
    %631 = vmatpush1.bf16.msra.mxu0 0
    %632 = vmatprep.subr.bf16.mxu0 0
    %633 = vmatpush1.bf16.msra.mxu0 0
    %634 = vmatprep.subr.bf16.mxu0 0
    %635 = vmatpush1.bf16.msra.mxu0 0
    %636 = vmatprep.subr.bf16.mxu0 0
    %637 = vmatpush1.bf16.msra.mxu0 0
    %638 = vmatprep.subr.bf16.mxu0 0
    %639 = vmatpush1.bf16.msra.mxu0 0
    %640 = vmatprep.mubr.bf16.mxu0 0
    %641 = vmatmul.mubr.bf16.gmra.mrb[0].mxu0 %v536
    %v642 = vpop.f32.mrb[0].mxu0
    %v643 = vadd.f32 0.0, %v642
    %v644 = vpop.f32.mrb[0].mxu0
    %v645 = vpop.f32.mrb[0].mxu0
    %v646 = vadd.f32 0.0, %v645
    %v647 = vpop.f32.mrb[0].mxu0
    %648 = vmatprep.mubr.bf16.mxu0 0
    %649 = vmatmul.mubr.bf16.gmra.mrb[0].mxu0 %v537
    %v650 = vpop.f32.mrb[0].mxu0
    %v651 = vadd.f32 0.0, %v650
    %v652 = vpop.f32.mrb[0].mxu0
    %v653 = vpop.f32.mrb[0].mxu0
    %v654 = vadd.f32 0.0, %v653
    %v655 = vpop.f32.mrb[0].mxu0
    %656 = vmatprep.mubr.bf16.mxu0 0
    %657 = vmatmul.mubr.bf16.gmra.mrb[0].mxu0 %v538
    %v658 = vpop.f32.mrb[0].mxu0
    %v659 = vadd.f32 0.0, %v658
    %v660 = vpop.f32.mrb[0].mxu0
    %v661 = vpop.f32.mrb[0].mxu0
    %v662 = vadd.f32 0.0, %v661
    %v663 = vpop.f32.mrb[0].mxu0
    %664 = vmatprep.mubr.bf16.mxu0 0
    %665 = vmatmul.mubr.bf16.gmra.mrb[0].mxu0 %v539
    %v666 = vpop.f32.mrb[0].mxu0
    %v667 = vadd.f32 0.0, %v666
    %v668 = vpop.f32.mrb[0].mxu0
    %v669 = vpop.f32.mrb[0].mxu0
    %v670 = vadd.f32 0.0, %v669
    %v671 = vpop.f32.mrb[0].mxu0
    %672 = vmatprep.mubr.bf16.mxu0 0
    %673 = vmatmul.mubr.bf16.gmra.mrb[0].mxu0 %v540
    %v674 = vpop.f32.mrb[0].mxu0
    %v675 = vadd.f32 0.0, %v674
    %v676 = vpop.f32.mrb[0].mxu0
    %v677 = vpop.f32.mrb[0].mxu0
    %v678 = vadd.f32 0.0, %v677
    %v679 = vpop.f32.mrb[0].mxu0
    %680 = vmatprep.mubr.bf16.mxu0 0
    %681 = vmatmul.mubr.bf16.gmra.mrb[0].mxu0 %v541
    %v682 = vpop.f32.mrb[0].mxu0
    %v683 = vadd.f32 0.0, %v682
    %v684 = vpop.f32.mrb[0].mxu0
    %v685 = vpop.f32.mrb[0].mxu0
    %v686 = vadd.f32 0.0, %v685
    %v687 = vpop.f32.mrb[0].mxu0
    %688 = vmatprep.mubr.bf16.mxu0 0
    %689 = vmatmul.mubr.bf16.gmra.mrb[0].mxu0 %v542
    %v690 = vpop.f32.mrb[0].mxu0
    %v691 = vadd.f32 0.0, %v690
    %v692 = vpop.f32.mrb[0].mxu0
    %v693 = vpop.f32.mrb[0].mxu0
    %v694 = vadd.f32 0.0, %v693
    %v695 = vpop.f32.mrb[0].mxu0
    %696 = vmatprep.mubr.bf16.mxu0 0
    %697 = vmatmul.mubr.bf16.gmra.mrb[0].mxu0 %v543
    %v698 = vpop.f32.mrb[0].mxu0
    %v699 = vadd.f32 0.0, %v698
    %v700 = vpop.f32.mrb[0].mxu0
    %v701 = vpop.f32.mrb[0].mxu0
    %v702 = vadd.f32 0.0, %v701
    %v703 = vpop.f32.mrb[0].mxu0
    %704 = vdwg.mxu0
    %v705 = vpack.c.bf16 %v646, %v643
    %v706 = vpack.c.bf16 %v654, %v651
    %v707 = vpack.c.bf16 %v662, %v659
    %v708 = vpack.c.bf16 %v670, %v667
    %v709 = vpack.c.bf16 %v678, %v675
    %v710 = vpack.c.bf16 %v686, %v683
    %v711 = vpack.c.bf16 %v694, %v691
    %v712 = vpack.c.bf16 %v702, %v699
    %v713 = vld [vmem:[%s5] sm:$0x1]
    %v715 = vlaneseq
    %v716 = vshrl.u32 %v715, 7
    %v717 = vsub.s32 0, %v716
    %v718 = vrot.slane %v713, %v717
    %720 = vmatprep.subr.bf16.mxu0 0
    %721 = vmatpush1.bf16.msra.mxu0 %v705
    %722 = vmatprep.subr.bf16.mxu0 0
    %723 = vmatpush1.bf16.msra.mxu0 %v706
    %724 = vmatprep.subr.bf16.mxu0 0
    %725 = vmatpush1.bf16.msra.mxu0 %v707
    %726 = vmatprep.subr.bf16.mxu0 0
    %727 = vmatpush1.bf16.msra.mxu0 %v708
    %728 = vmatprep.subr.bf16.mxu0 0
    %729 = vmatpush1.bf16.msra.mxu0 %v709
    %730 = vmatprep.subr.bf16.mxu0 0
    %731 = vmatpush1.bf16.msra.mxu0 %v710
    %732 = vmatprep.subr.bf16.mxu0 0
    %733 = vmatpush1.bf16.msra.mxu0 %v711
    %734 = vmatprep.subr.bf16.mxu0 0
    %735 = vmatpush1.bf16.msra.mxu0 %v712
    %736 = vmatprep.subr.bf16.mxu0 0
    %737 = vmatpush1.bf16.msra.mxu0 0
    %738 = vmatprep.subr.bf16.mxu0 0
    %739 = vmatpush1.bf16.msra.mxu0 0
    %740 = vmatprep.subr.bf16.mxu0 0
    %741 = vmatpush1.bf16.msra.mxu0 0
    %742 = vmatprep.subr.bf16.mxu0 0
    %743 = vmatpush1.bf16.msra.mxu0 0
    %744 = vmatprep.subr.bf16.mxu0 0
    %745 = vmatpush1.bf16.msra.mxu0 0
    %746 = vmatprep.subr.bf16.mxu0 0
    %747 = vmatpush1.bf16.msra.mxu0 0
    %748 = vmatprep.subr.bf16.mxu0 0
    %749 = vmatpush1.bf16.msra.mxu0 0
    %750 = vmatprep.subr.bf16.mxu0 0
    %751 = vmatpush1.bf16.msra.mxu0 0
    %752 = vmatprep.mubr.bf16.mxu0 0
    %753 = vmatmul.mubr.bf16.gmra.mrb[0].mxu0 %v407
    %v754 = vpop.f32.mrb[0].mxu0
    %v755 = vadd.f32 %v718, %v754
    %v756 = vpop.f32.mrb[0].mxu0
    %v757 = vpop.f32.mrb[0].mxu0
    %v758 = vadd.f32 %v718, %v757
    %v759 = vpop.f32.mrb[0].mxu0
    %760 = vmatprep.mubr.bf16.mxu0 0
    %761 = vmatmul.mubr.bf16.gmra.mrb[0].mxu0 %v408
    %v762 = vpop.f32.mrb[0].mxu0
    %v763 = vadd.f32 %v718, %v762
    %v764 = vpop.f32.mrb[0].mxu0
    %v765 = vpop.f32.mrb[0].mxu0
    %v766 = vadd.f32 %v718, %v765
    %v767 = vpop.f32.mrb[0].mxu0
    %768 = vmatprep.mubr.bf16.mxu0 0
    %769 = vmatmul.mubr.bf16.gmra.mrb[0].mxu0 %v409
    %v770 = vpop.f32.mrb[0].mxu0
    %v771 = vadd.f32 %v718, %v770
    %v772 = vpop.f32.mrb[0].mxu0
    %v773 = vpop.f32.mrb[0].mxu0
    %v774 = vadd.f32 %v718, %v773
    %v775 = vpop.f32.mrb[0].mxu0
    %776 = vmatprep.mubr.bf16.mxu0 0
    %777 = vmatmul.mubr.bf16.gmra.mrb[0].mxu0 %v410
    %v778 = vpop.f32.mrb[0].mxu0
    %v779 = vadd.f32 %v718, %v778
    %v780 = vpop.f32.mrb[0].mxu0
    %v781 = vpop.f32.mrb[0].mxu0
    %v782 = vadd.f32 %v718, %v781
    %v783 = vpop.f32.mrb[0].mxu0
    %784 = vmatprep.mubr.bf16.mxu0 0
    %785 = vmatmul.mubr.bf16.gmra.mrb[0].mxu0 %v411
    %v786 = vpop.f32.mrb[0].mxu0
    %v787 = vadd.f32 %v718, %v786
    %v788 = vpop.f32.mrb[0].mxu0
    %v789 = vpop.f32.mrb[0].mxu0
    %v790 = vadd.f32 %v718, %v789
    %v791 = vpop.f32.mrb[0].mxu0
    %792 = vmatprep.mubr.bf16.mxu0 0
    %793 = vmatmul.mubr.bf16.gmra.mrb[0].mxu0 %v412
    %v794 = vpop.f32.mrb[0].mxu0
    %v795 = vadd.f32 %v718, %v794
    %v796 = vpop.f32.mrb[0].mxu0
    %v797 = vpop.f32.mrb[0].mxu0
    %v798 = vadd.f32 %v718, %v797
    %v799 = vpop.f32.mrb[0].mxu0
    %800 = vmatprep.mubr.bf16.mxu0 0
    %801 = vmatmul.mubr.bf16.gmra.mrb[0].mxu0 %v413
    %v802 = vpop.f32.mrb[0].mxu0
    %v803 = vadd.f32 %v718, %v802
    %v804 = vpop.f32.mrb[0].mxu0
    %v805 = vpop.f32.mrb[0].mxu0
    %v806 = vadd.f32 %v718, %v805
    %v807 = vpop.f32.mrb[0].mxu0
    %808 = vmatprep.mubr.bf16.mxu0 0
    %809 = vmatmul.mubr.bf16.gmra.mrb[0].mxu0 %v414
    %v810 = vpop.f32.mrb[0].mxu0
    %v811 = vadd.f32 %v718, %v810
    %v812 = vpop.f32.mrb[0].mxu0
    %v813 = vpop.f32.mrb[0].mxu0
    %v814 = vadd.f32 %v718, %v813
    %v815 = vpop.f32.mrb[0].mxu0
    %816 = vdwg.mxu0
    %v817 = vmax.f32 %v755, 0.0
    %v818 = vmax.f32 %v758, 0.0
    %v819 = vmax.f32 %v763, 0.0
    %v820 = vmax.f32 %v766, 0.0
    %v821 = vmax.f32 %v771, 0.0
    %v822 = vmax.f32 %v774, 0.0
    %v823 = vmax.f32 %v779, 0.0
    %v824 = vmax.f32 %v782, 0.0
    %v825 = vmax.f32 %v787, 0.0
    %v826 = vmax.f32 %v790, 0.0
    %v827 = vmax.f32 %v795, 0.0
    %v828 = vmax.f32 %v798, 0.0
    %v829 = vmax.f32 %v803, 0.0
    %v830 = vmax.f32 %v806, 0.0
    %v831 = vmax.f32 %v811, 0.0
    %v832 = vmax.f32 %v814, 0.0
    %v833 = vpack.c.bf16 %v818, %v817
    %v834 = vpack.c.bf16 %v820, %v819
    %v835 = vpack.c.bf16 %v822, %v821
    %v836 = vpack.c.bf16 %v824, %v823
    %v837 = vpack.c.bf16 %v826, %v825
    %v838 = vpack.c.bf16 %v828, %v827
    %v839 = vpack.c.bf16 %v830, %v829
    %v840 = vpack.c.bf16 %v832, %v831
    %v841 = vld [vmem:[#allocation10] sm:$0xf]
    %v842 = vld [vmem:[#allocation10 + $0x4] sm:$0xf]
    %v843 = vld [vmem:[#allocation10 + $0x8] sm:$0xf]
    %v844 = vld [vmem:[#allocation10 + $0xc] sm:$0xf]
    %v845 = vld [vmem:[#allocation10 + $0x10] sm:$0xf]
    %v846 = vld [vmem:[#allocation10 + $0x14] sm:$0xf]
    %v847 = vld [vmem:[#allocation10 + $0x18] sm:$0xf]
    %v848 = vld [vmem:[#allocation10 + $0x1c] sm:$0xf]
    %v849 = vld [vmem:[#allocation10 + $0x20] sm:$0xf]
    %v850 = vld [vmem:[#allocation10 + $0x24] sm:$0xf]
    %v851 = vld [vmem:[#allocation10 + $0x28] sm:$0xf]
    %v852 = vld [vmem:[#allocation10 + $0x2c] sm:$0xf]
    %v853 = vld [vmem:[#allocation10 + $0x30] sm:$0xf]
    %v854 = vld [vmem:[#allocation10 + $0x34] sm:$0xf]
    %v855 = vld [vmem:[#allocation10 + $0x38] sm:$0xf]
    %v856 = vld [vmem:[#allocation10 + $0x3c] sm:$0xf]
    %v873 = vunpack.c.l.b16 %v841
    %v874 = vunpack.c.l.b16 %v842
    %v875 = vunpack.c.l.b16 %v843
    %v876 = vunpack.c.l.b16 %v844
    %v877 = vunpack.c.l.b16 %v845
    %v878 = vunpack.c.l.b16 %v846
    %v879 = vunpack.c.l.b16 %v847
    %v880 = vunpack.c.l.b16 %v848
    %v881 = vunpack.c.l.b16 %v849
    %v882 = vunpack.c.l.b16 %v850
    %v883 = vunpack.c.l.b16 %v851
    %v884 = vunpack.c.l.b16 %v852
    %v885 = vunpack.c.l.b16 %v853
    %v886 = vunpack.c.l.b16 %v854
    %v887 = vunpack.c.l.b16 %v855
    %v888 = vunpack.c.l.b16 %v856
    %v889 = vpack.c.b16 %v874, %v873
    %v890 = vpack.c.b16 %v876, %v875
    %v891 = vpack.c.b16 %v878, %v877
    %v892 = vpack.c.b16 %v880, %v879
    %v893 = vpack.c.b16 %v882, %v881
    %v894 = vpack.c.b16 %v884, %v883
    %v895 = vpack.c.b16 %v886, %v885
    %v896 = vpack.c.b16 %v888, %v887
    %905 = vmatprep.subr.bf16.mxu0 0
    %906 = vmatpush1.bf16.msra.mxu0 %v889
    %907 = vmatprep.subr.bf16.mxu0 0
    %908 = vmatpush1.bf16.msra.mxu0 %v890
    %909 = vmatprep.subr.bf16.mxu0 0
    %910 = vmatpush1.bf16.msra.mxu0 %v891
    %911 = vmatprep.subr.bf16.mxu0 0
    %912 = vmatpush1.bf16.msra.mxu0 %v892
    %913 = vmatprep.subr.bf16.mxu0 0
    %914 = vmatpush1.bf16.msra.mxu0 %v893
    %915 = vmatprep.subr.bf16.mxu0 0
    %916 = vmatpush1.bf16.msra.mxu0 %v894
    %917 = vmatprep.subr.bf16.mxu0 0
    %918 = vmatpush1.bf16.msra.mxu0 %v895
    %919 = vmatprep.subr.bf16.mxu0 0
    %920 = vmatpush1.bf16.msra.mxu0 %v896
    %921 = vmatprep.subr.bf16.mxu0 0
    %922 = vmatpush1.bf16.msra.mxu0 0
    %923 = vmatprep.subr.bf16.mxu0 0
    %924 = vmatpush1.bf16.msra.mxu0 0
    %925 = vmatprep.subr.bf16.mxu0 0
    %926 = vmatpush1.bf16.msra.mxu0 0
    %927 = vmatprep.subr.bf16.mxu0 0
    %928 = vmatpush1.bf16.msra.mxu0 0
    %929 = vmatprep.subr.bf16.mxu0 0
    %930 = vmatpush1.bf16.msra.mxu0 0
    %931 = vmatprep.subr.bf16.mxu0 0
    %932 = vmatpush1.bf16.msra.mxu0 0
    %933 = vmatprep.subr.bf16.mxu0 0
    %934 = vmatpush1.bf16.msra.mxu0 0
    %935 = vmatprep.subr.bf16.mxu0 0
    %936 = vmatpush1.bf16.msra.mxu0 0
    %937 = vmatprep.mubr.bf16.mxu0 0
    %938 = vmatmul.mubr.bf16.gmra.mrb[0].mxu0 %v833
    %v939 = vpop.f32.mrb[0].mxu0
    %v940 = vadd.f32 0.0, %v939
    %v941 = vpop.f32.mrb[0].mxu0
    %v942 = vpop.f32.mrb[0].mxu0
    %v943 = vadd.f32 0.0, %v942
    %v944 = vpop.f32.mrb[0].mxu0
    %945 = vmatprep.mubr.bf16.mxu0 0
    %946 = vmatmul.mubr.bf16.gmra.mrb[0].mxu0 %v834
    %v947 = vpop.f32.mrb[0].mxu0
    %v948 = vadd.f32 0.0, %v947
    %v949 = vpop.f32.mrb[0].mxu0
    %v950 = vpop.f32.mrb[0].mxu0
    %v951 = vadd.f32 0.0, %v950
    %v952 = vpop.f32.mrb[0].mxu0
    %953 = vmatprep.mubr.bf16.mxu0 0
    %954 = vmatmul.mubr.bf16.gmra.mrb[0].mxu0 %v835
    %v955 = vpop.f32.mrb[0].mxu0
    %v956 = vadd.f32 0.0, %v955
    %v957 = vpop.f32.mrb[0].mxu0
    %v958 = vpop.f32.mrb[0].mxu0
    %v959 = vadd.f32 0.0, %v958
    %v960 = vpop.f32.mrb[0].mxu0
    %961 = vmatprep.mubr.bf16.mxu0 0
    %962 = vmatmul.mubr.bf16.gmra.mrb[0].mxu0 %v836
    %v963 = vpop.f32.mrb[0].mxu0
    %v964 = vadd.f32 0.0, %v963
    %v965 = vpop.f32.mrb[0].mxu0
    %v966 = vpop.f32.mrb[0].mxu0
    %v967 = vadd.f32 0.0, %v966
    %v968 = vpop.f32.mrb[0].mxu0
    %969 = vmatprep.mubr.bf16.mxu0 0
    %970 = vmatmul.mubr.bf16.gmra.mrb[0].mxu0 %v837
    %v971 = vpop.f32.mrb[0].mxu0
    %v972 = vadd.f32 0.0, %v971
    %v973 = vpop.f32.mrb[0].mxu0
    %v974 = vpop.f32.mrb[0].mxu0
    %v975 = vadd.f32 0.0, %v974
    %v976 = vpop.f32.mrb[0].mxu0
    %977 = vmatprep.mubr.bf16.mxu0 0
    %978 = vmatmul.mubr.bf16.gmra.mrb[0].mxu0 %v838
    %v979 = vpop.f32.mrb[0].mxu0
    %v980 = vadd.f32 0.0, %v979
    %v981 = vpop.f32.mrb[0].mxu0
    %v982 = vpop.f32.mrb[0].mxu0
    %v983 = vadd.f32 0.0, %v982
    %v984 = vpop.f32.mrb[0].mxu0
    %985 = vmatprep.mubr.bf16.mxu0 0
    %986 = vmatmul.mubr.bf16.gmra.mrb[0].mxu0 %v839
    %v987 = vpop.f32.mrb[0].mxu0
    %v988 = vadd.f32 0.0, %v987
    %v989 = vpop.f32.mrb[0].mxu0
    %v990 = vpop.f32.mrb[0].mxu0
    %v991 = vadd.f32 0.0, %v990
    %v992 = vpop.f32.mrb[0].mxu0
    %993 = vmatprep.mubr.bf16.mxu0 0
    %994 = vmatmul.mubr.bf16.gmra.mrb[0].mxu0 %v840
    %v995 = vpop.f32.mrb[0].mxu0
    %v996 = vadd.f32 0.0, %v995
    %v997 = vpop.f32.mrb[0].mxu0
    %v998 = vpop.f32.mrb[0].mxu0
    %v999 = vadd.f32 0.0, %v998
    %v1000 = vpop.f32.mrb[0].mxu0
    %1001 = vdwg.mxu0
    %v1002 = vpack.c.bf16 %v943, %v940
    %v1003 = vpack.c.bf16 %v951, %v948
    %v1004 = vpack.c.bf16 %v959, %v956
    %v1005 = vpack.c.bf16 %v967, %v964
    %v1006 = vpack.c.bf16 %v975, %v972
    %v1007 = vpack.c.bf16 %v983, %v980
    %v1008 = vpack.c.bf16 %v991, %v988
    %v1009 = vpack.c.bf16 %v999, %v996
    %v1010 = vld [vmem:[%s7] sm:$0x1]
    %v1012 = vlaneseq
    %v1013 = vshrl.u32 %v1012, 7
    %v1014 = vsub.s32 0, %v1013
    %v1015 = vrot.slane %v1010, %v1014
    %1017 = vmatprep.subr.bf16.mxu0 0
    %1018 = vmatpush1.bf16.msra.mxu0 %v1002
    %1019 = vmatprep.subr.bf16.mxu0 0
    %1020 = vmatpush1.bf16.msra.mxu0 %v1003
    %1021 = vmatprep.subr.bf16.mxu0 0
    %1022 = vmatpush1.bf16.msra.mxu0 %v1004
    %1023 = vmatprep.subr.bf16.mxu0 0
    %1024 = vmatpush1.bf16.msra.mxu0 %v1005
    %1025 = vmatprep.subr.bf16.mxu0 0
    %1026 = vmatpush1.bf16.msra.mxu0 %v1006
    %1027 = vmatprep.subr.bf16.mxu0 0
    %1028 = vmatpush1.bf16.msra.mxu0 %v1007
    %1029 = vmatprep.subr.bf16.mxu0 0
    %1030 = vmatpush1.bf16.msra.mxu0 %v1008
    %1031 = vmatprep.subr.bf16.mxu0 0
    %1032 = vmatpush1.bf16.msra.mxu0 %v1009
    %1033 = vmatprep.subr.bf16.mxu0 0
    %1034 = vmatpush1.bf16.msra.mxu0 0
    %1035 = vmatprep.subr.bf16.mxu0 0
    %1036 = vmatpush1.bf16.msra.mxu0 0
    %1037 = vmatprep.subr.bf16.mxu0 0
    %1038 = vmatpush1.bf16.msra.mxu0 0
    %1039 = vmatprep.subr.bf16.mxu0 0
    %1040 = vmatpush1.bf16.msra.mxu0 0
    %1041 = vmatprep.subr.bf16.mxu0 0
    %1042 = vmatpush1.bf16.msra.mxu0 0
    %1043 = vmatprep.subr.bf16.mxu0 0
    %1044 = vmatpush1.bf16.msra.mxu0 0
    %1045 = vmatprep.subr.bf16.mxu0 0
    %1046 = vmatpush1.bf16.msra.mxu0 0
    %1047 = vmatprep.subr.bf16.mxu0 0
    %1048 = vmatpush1.bf16.msra.mxu0 0
    %1049 = vmatprep.mubr.bf16.mxu0 0
    %1050 = vmatmul.mubr.bf16.gmra.mrb[0].mxu0 %v407
    %v1051 = vpop.f32.mrb[0].mxu0
    %v1052 = vadd.f32 %v1015, %v1051
    %v1053 = vpop.f32.mrb[0].mxu0
    %v1054 = vpop.f32.mrb[0].mxu0
    %v1055 = vadd.f32 %v1015, %v1054
    %v1056 = vpop.f32.mrb[0].mxu0
    %1057 = vmatprep.mubr.bf16.mxu0 0
    %1058 = vmatmul.mubr.bf16.gmra.mrb[0].mxu0 %v408
    %v1059 = vpop.f32.mrb[0].mxu0
    %v1060 = vadd.f32 %v1015, %v1059
    %v1061 = vpop.f32.mrb[0].mxu0
    %v1062 = vpop.f32.mrb[0].mxu0
    %v1063 = vadd.f32 %v1015, %v1062
    %v1064 = vpop.f32.mrb[0].mxu0
    %1065 = vmatprep.mubr.bf16.mxu0 0
    %1066 = vmatmul.mubr.bf16.gmra.mrb[0].mxu0 %v409
    %v1067 = vpop.f32.mrb[0].mxu0
    %v1068 = vadd.f32 %v1015, %v1067
    %v1069 = vpop.f32.mrb[0].mxu0
    %v1070 = vpop.f32.mrb[0].mxu0
    %v1071 = vadd.f32 %v1015, %v1070
    %v1072 = vpop.f32.mrb[0].mxu0
    %1073 = vmatprep.mubr.bf16.mxu0 0
    %1074 = vmatmul.mubr.bf16.gmra.mrb[0].mxu0 %v410
    %v1075 = vpop.f32.mrb[0].mxu0
    %v1076 = vadd.f32 %v1015, %v1075
    %v1077 = vpop.f32.mrb[0].mxu0
    %v1078 = vpop.f32.mrb[0].mxu0
    %v1079 = vadd.f32 %v1015, %v1078
    %v1080 = vpop.f32.mrb[0].mxu0
    %1081 = vmatprep.mubr.bf16.mxu0 0
    %1082 = vmatmul.mubr.bf16.gmra.mrb[0].mxu0 %v411
    %v1083 = vpop.f32.mrb[0].mxu0
    %v1084 = vadd.f32 %v1015, %v1083
    %v1085 = vpop.f32.mrb[0].mxu0
    %v1086 = vpop.f32.mrb[0].mxu0
    %v1087 = vadd.f32 %v1015, %v1086
    %v1088 = vpop.f32.mrb[0].mxu0
    %1089 = vmatprep.mubr.bf16.mxu0 0
    %1090 = vmatmul.mubr.bf16.gmra.mrb[0].mxu0 %v412
    %v1091 = vpop.f32.mrb[0].mxu0
    %v1092 = vadd.f32 %v1015, %v1091
    %v1093 = vpop.f32.mrb[0].mxu0
    %v1094 = vpop.f32.mrb[0].mxu0
    %v1095 = vadd.f32 %v1015, %v1094
    %v1096 = vpop.f32.mrb[0].mxu0
    %1097 = vmatprep.mubr.bf16.mxu0 0
    %1098 = vmatmul.mubr.bf16.gmra.mrb[0].mxu0 %v413
    %v1099 = vpop.f32.mrb[0].mxu0
    %v1100 = vadd.f32 %v1015, %v1099
    %v1101 = vpop.f32.mrb[0].mxu0
    %v1102 = vpop.f32.mrb[0].mxu0
    %v1103 = vadd.f32 %v1015, %v1102
    %v1104 = vpop.f32.mrb[0].mxu0
    %1105 = vmatprep.mubr.bf16.mxu0 0
    %1106 = vmatmul.mubr.bf16.gmra.mrb[0].mxu0 %v414
    %v1107 = vpop.f32.mrb[0].mxu0
    %v1108 = vadd.f32 %v1015, %v1107
    %v1109 = vpop.f32.mrb[0].mxu0
    %v1110 = vpop.f32.mrb[0].mxu0
    %v1111 = vadd.f32 %v1015, %v1110
    %v1112 = vpop.f32.mrb[0].mxu0
    %1113 = vdwg.mxu0
    %v1114 = vmax.f32 %v1052, 0.0
    %v1115 = vmax.f32 %v1055, 0.0
    %v1116 = vmax.f32 %v1060, 0.0
    %v1117 = vmax.f32 %v1063, 0.0
    %v1118 = vmax.f32 %v1068, 0.0
    %v1119 = vmax.f32 %v1071, 0.0
    %v1120 = vmax.f32 %v1076, 0.0
    %v1121 = vmax.f32 %v1079, 0.0
    %v1122 = vmax.f32 %v1084, 0.0
    %v1123 = vmax.f32 %v1087, 0.0
    %v1124 = vmax.f32 %v1092, 0.0
    %v1125 = vmax.f32 %v1095, 0.0
    %v1126 = vmax.f32 %v1100, 0.0
    %v1127 = vmax.f32 %v1103, 0.0
    %v1128 = vmax.f32 %v1108, 0.0
    %v1129 = vmax.f32 %v1111, 0.0
    %v1130 = vpack.c.bf16 %v1115, %v1114
    %v1131 = vpack.c.bf16 %v1117, %v1116
    %v1132 = vpack.c.bf16 %v1119, %v1118
    %v1133 = vpack.c.bf16 %v1121, %v1120
    %v1134 = vpack.c.bf16 %v1123, %v1122
    %v1135 = vpack.c.bf16 %v1125, %v1124
    %v1136 = vpack.c.bf16 %v1127, %v1126
    %v1137 = vpack.c.bf16 %v1129, %v1128
    %v1138 = vld [vmem:[#allocation11] sm:$0xf]
    %v1139 = vld [vmem:[#allocation11 + $0x4] sm:$0xf]
    %v1140 = vld [vmem:[#allocation11 + $0x8] sm:$0xf]
    %v1141 = vld [vmem:[#allocation11 + $0xc] sm:$0xf]
    %v1142 = vld [vmem:[#allocation11 + $0x10] sm:$0xf]
    %v1143 = vld [vmem:[#allocation11 + $0x14] sm:$0xf]
    %v1144 = vld [vmem:[#allocation11 + $0x18] sm:$0xf]
    %v1145 = vld [vmem:[#allocation11 + $0x1c] sm:$0xf]
    %v1146 = vld [vmem:[#allocation11 + $0x20] sm:$0xf]
    %v1147 = vld [vmem:[#allocation11 + $0x24] sm:$0xf]
    %v1148 = vld [vmem:[#allocation11 + $0x28] sm:$0xf]
    %v1149 = vld [vmem:[#allocation11 + $0x2c] sm:$0xf]
    %v1150 = vld [vmem:[#allocation11 + $0x30] sm:$0xf]
    %v1151 = vld [vmem:[#allocation11 + $0x34] sm:$0xf]
    %v1152 = vld [vmem:[#allocation11 + $0x38] sm:$0xf]
    %v1153 = vld [vmem:[#allocation11 + $0x3c] sm:$0xf]
    %v1170 = vunpack.c.l.b16 %v1138
    %v1171 = vunpack.c.l.b16 %v1139
    %v1172 = vunpack.c.l.b16 %v1140
    %v1173 = vunpack.c.l.b16 %v1141
    %v1174 = vunpack.c.l.b16 %v1142
    %v1175 = vunpack.c.l.b16 %v1143
    %v1176 = vunpack.c.l.b16 %v1144
    %v1177 = vunpack.c.l.b16 %v1145
    %v1178 = vunpack.c.l.b16 %v1146
    %v1179 = vunpack.c.l.b16 %v1147
    %v1180 = vunpack.c.l.b16 %v1148
    %v1181 = vunpack.c.l.b16 %v1149
    %v1182 = vunpack.c.l.b16 %v1150
    %v1183 = vunpack.c.l.b16 %v1151
    %v1184 = vunpack.c.l.b16 %v1152
    %v1185 = vunpack.c.l.b16 %v1153
    %v1186 = vpack.c.b16 %v1171, %v1170
    %v1187 = vpack.c.b16 %v1173, %v1172
    %v1188 = vpack.c.b16 %v1175, %v1174
    %v1189 = vpack.c.b16 %v1177, %v1176
    %v1190 = vpack.c.b16 %v1179, %v1178
    %v1191 = vpack.c.b16 %v1181, %v1180
    %v1192 = vpack.c.b16 %v1183, %v1182
    %v1193 = vpack.c.b16 %v1185, %v1184
    %1202 = vmatprep.subr.bf16.mxu0 0
    %1203 = vmatpush1.bf16.msra.mxu0 %v1186
    %1204 = vmatprep.subr.bf16.mxu0 0
    %1205 = vmatpush1.bf16.msra.mxu0 %v1187
    %1206 = vmatprep.subr.bf16.mxu0 0
    %1207 = vmatpush1.bf16.msra.mxu0 %v1188
    %1208 = vmatprep.subr.bf16.mxu0 0
    %1209 = vmatpush1.bf16.msra.mxu0 %v1189
    %1210 = vmatprep.subr.bf16.mxu0 0
    %1211 = vmatpush1.bf16.msra.mxu0 %v1190
    %1212 = vmatprep.subr.bf16.mxu0 0
    %1213 = vmatpush1.bf16.msra.mxu0 %v1191
    %1214 = vmatprep.subr.bf16.mxu0 0
    %1215 = vmatpush1.bf16.msra.mxu0 %v1192
    %1216 = vmatprep.subr.bf16.mxu0 0
    %1217 = vmatpush1.bf16.msra.mxu0 %v1193
    %1218 = vmatprep.subr.bf16.mxu0 0
    %1219 = vmatpush1.bf16.msra.mxu0 0
    %1220 = vmatprep.subr.bf16.mxu0 0
    %1221 = vmatpush1.bf16.msra.mxu0 0
    %1222 = vmatprep.subr.bf16.mxu0 0
    %1223 = vmatpush1.bf16.msra.mxu0 0
    %1224 = vmatprep.subr.bf16.mxu0 0
    %1225 = vmatpush1.bf16.msra.mxu0 0
    %1226 = vmatprep.subr.bf16.mxu0 0
    %1227 = vmatpush1.bf16.msra.mxu0 0
    %1228 = vmatprep.subr.bf16.mxu0 0
    %1229 = vmatpush1.bf16.msra.mxu0 0
    %1230 = vmatprep.subr.bf16.mxu0 0
    %1231 = vmatpush1.bf16.msra.mxu0 0
    %1232 = vmatprep.subr.bf16.mxu0 0
    %1233 = vmatpush1.bf16.msra.mxu0 0
    %1234 = vmatprep.mubr.bf16.mxu0 0
    %1235 = vmatmul.mubr.bf16.gmra.mrb[0].mxu0 %v1130
    %v1236 = vpop.f32.mrb[0].mxu0
    %v1237 = vadd.f32 0.0, %v1236
    %v1238 = vpop.f32.mrb[0].mxu0
    %v1239 = vpop.f32.mrb[0].mxu0
    %v1240 = vadd.f32 0.0, %v1239
    %v1241 = vpop.f32.mrb[0].mxu0
    %1242 = vmatprep.mubr.bf16.mxu0 0
    %1243 = vmatmul.mubr.bf16.gmra.mrb[0].mxu0 %v1131
    %v1244 = vpop.f32.mrb[0].mxu0
    %v1245 = vadd.f32 0.0, %v1244
    %v1246 = vpop.f32.mrb[0].mxu0
    %v1247 = vpop.f32.mrb[0].mxu0
    %v1248 = vadd.f32 0.0, %v1247
    %v1249 = vpop.f32.mrb[0].mxu0
    %1250 = vmatprep.mubr.bf16.mxu0 0
    %1251 = vmatmul.mubr.bf16.gmra.mrb[0].mxu0 %v1132
    %v1252 = vpop.f32.mrb[0].mxu0
    %v1253 = vadd.f32 0.0, %v1252
    %v1254 = vpop.f32.mrb[0].mxu0
    %v1255 = vpop.f32.mrb[0].mxu0
    %v1256 = vadd.f32 0.0, %v1255
    %v1257 = vpop.f32.mrb[0].mxu0
    %1258 = vmatprep.mubr.bf16.mxu0 0
    %1259 = vmatmul.mubr.bf16.gmra.mrb[0].mxu0 %v1133
    %v1260 = vpop.f32.mrb[0].mxu0
    %v1261 = vadd.f32 0.0, %v1260
    %v1262 = vpop.f32.mrb[0].mxu0
    %v1263 = vpop.f32.mrb[0].mxu0
    %v1264 = vadd.f32 0.0, %v1263
    %v1265 = vpop.f32.mrb[0].mxu0
    %1266 = vmatprep.mubr.bf16.mxu0 0
    %1267 = vmatmul.mubr.bf16.gmra.mrb[0].mxu0 %v1134
    %v1268 = vpop.f32.mrb[0].mxu0
    %v1269 = vadd.f32 0.0, %v1268
    %v1270 = vpop.f32.mrb[0].mxu0
    %v1271 = vpop.f32.mrb[0].mxu0
    %v1272 = vadd.f32 0.0, %v1271
    %v1273 = vpop.f32.mrb[0].mxu0
    %1274 = vmatprep.mubr.bf16.mxu0 0
    %1275 = vmatmul.mubr.bf16.gmra.mrb[0].mxu0 %v1135
    %v1276 = vpop.f32.mrb[0].mxu0
    %v1277 = vadd.f32 0.0, %v1276
    %v1278 = vpop.f32.mrb[0].mxu0
    %v1279 = vpop.f32.mrb[0].mxu0
    %v1280 = vadd.f32 0.0, %v1279
    %v1281 = vpop.f32.mrb[0].mxu0
    %1282 = vmatprep.mubr.bf16.mxu0 0
    %1283 = vmatmul.mubr.bf16.gmra.mrb[0].mxu0 %v1136
    %v1284 = vpop.f32.mrb[0].mxu0
    %v1285 = vadd.f32 0.0, %v1284
    %v1286 = vpop.f32.mrb[0].mxu0
    %v1287 = vpop.f32.mrb[0].mxu0
    %v1288 = vadd.f32 0.0, %v1287
    %v1289 = vpop.f32.mrb[0].mxu0
    %1290 = vmatprep.mubr.bf16.mxu0 0
    %1291 = vmatmul.mubr.bf16.gmra.mrb[0].mxu0 %v1137
    %v1292 = vpop.f32.mrb[0].mxu0
    %v1293 = vadd.f32 0.0, %v1292
    %v1294 = vpop.f32.mrb[0].mxu0
    %v1295 = vpop.f32.mrb[0].mxu0
    %v1296 = vadd.f32 0.0, %v1295
    %v1297 = vpop.f32.mrb[0].mxu0
    %1298 = vdwg.mxu0
    %v1299 = vpack.c.bf16 %v1240, %v1237
    %v1300 = vpack.c.bf16 %v1248, %v1245
    %v1301 = vpack.c.bf16 %v1256, %v1253
    %v1302 = vpack.c.bf16 %v1264, %v1261
    %v1303 = vpack.c.bf16 %v1272, %v1269
    %v1304 = vpack.c.bf16 %v1280, %v1277
    %v1305 = vpack.c.bf16 %v1288, %v1285
    %v1306 = vpack.c.bf16 %v1296, %v1293
    %v1307 = vld [vmem:[%s9] sm:$0x1]
    %v1309 = vlaneseq
    %v1310 = vshrl.u32 %v1309, 7
    %v1311 = vsub.s32 0, %v1310
    %v1312 = vrot.slane %v1307, %v1311
    %1314 = vmatprep.subr.bf16.mxu0 0
    %1315 = vmatpush1.bf16.msra.mxu0 %v1299
    %1316 = vmatprep.subr.bf16.mxu0 0
    %1317 = vmatpush1.bf16.msra.mxu0 %v1300
    %1318 = vmatprep.subr.bf16.mxu0 0
    %1319 = vmatpush1.bf16.msra.mxu0 %v1301
    %1320 = vmatprep.subr.bf16.mxu0 0
    %1321 = vmatpush1.bf16.msra.mxu0 %v1302
    %1322 = vmatprep.subr.bf16.mxu0 0
    %1323 = vmatpush1.bf16.msra.mxu0 %v1303
    %1324 = vmatprep.subr.bf16.mxu0 0
    %1325 = vmatpush1.bf16.msra.mxu0 %v1304
    %1326 = vmatprep.subr.bf16.mxu0 0
    %1327 = vmatpush1.bf16.msra.mxu0 %v1305
    %1328 = vmatprep.subr.bf16.mxu0 0
    %1329 = vmatpush1.bf16.msra.mxu0 %v1306
    %1330 = vmatprep.subr.bf16.mxu0 0
    %1331 = vmatpush1.bf16.msra.mxu0 0
    %1332 = vmatprep.subr.bf16.mxu0 0
    %1333 = vmatpush1.bf16.msra.mxu0 0
    %1334 = vmatprep.subr.bf16.mxu0 0
    %1335 = vmatpush1.bf16.msra.mxu0 0
    %1336 = vmatprep.subr.bf16.mxu0 0
    %1337 = vmatpush1.bf16.msra.mxu0 0
    %1338 = vmatprep.subr.bf16.mxu0 0
    %1339 = vmatpush1.bf16.msra.mxu0 0
    %1340 = vmatprep.subr.bf16.mxu0 0
    %1341 = vmatpush1.bf16.msra.mxu0 0
    %1342 = vmatprep.subr.bf16.mxu0 0
    %1343 = vmatpush1.bf16.msra.mxu0 0
    %1344 = vmatprep.subr.bf16.mxu0 0
    %1345 = vmatpush1.bf16.msra.mxu0 0
    %1346 = vmatprep.mubr.bf16.mxu0 0
    %1347 = vmatmul.mubr.bf16.gmra.mrb[0].mxu0 %v407
    %v1348 = vpop.f32.mrb[0].mxu0
    %v1349 = vadd.f32 %v1312, %v1348
    %v1350 = vpop.f32.mrb[0].mxu0
    %v1351 = vpop.f32.mrb[0].mxu0
    %v1352 = vadd.f32 %v1312, %v1351
    %v1353 = vpop.f32.mrb[0].mxu0
    %1354 = vmatprep.mubr.bf16.mxu0 0
    %1355 = vmatmul.mubr.bf16.gmra.mrb[0].mxu0 %v408
    %v1356 = vpop.f32.mrb[0].mxu0
    %v1357 = vadd.f32 %v1312, %v1356
    %v1358 = vpop.f32.mrb[0].mxu0
    %v1359 = vpop.f32.mrb[0].mxu0
    %v1360 = vadd.f32 %v1312, %v1359
    %v1361 = vpop.f32.mrb[0].mxu0
    %1362 = vmatprep.mubr.bf16.mxu0 0
    %1363 = vmatmul.mubr.bf16.gmra.mrb[0].mxu0 %v409
    %v1364 = vpop.f32.mrb[0].mxu0
    %v1365 = vadd.f32 %v1312, %v1364
    %v1366 = vpop.f32.mrb[0].mxu0
    %v1367 = vpop.f32.mrb[0].mxu0
    %v1368 = vadd.f32 %v1312, %v1367
    %v1369 = vpop.f32.mrb[0].mxu0
    %1370 = vmatprep.mubr.bf16.mxu0 0
    %1371 = vmatmul.mubr.bf16.gmra.mrb[0].mxu0 %v410
    %v1372 = vpop.f32.mrb[0].mxu0
    %v1373 = vadd.f32 %v1312, %v1372
    %v1374 = vpop.f32.mrb[0].mxu0
    %v1375 = vpop.f32.mrb[0].mxu0
    %v1376 = vadd.f32 %v1312, %v1375
    %v1377 = vpop.f32.mrb[0].mxu0
    %1378 = vmatprep.mubr.bf16.mxu0 0
    %1379 = vmatmul.mubr.bf16.gmra.mrb[0].mxu0 %v411
    %v1380 = vpop.f32.mrb[0].mxu0
    %v1381 = vadd.f32 %v1312, %v1380
    %v1382 = vpop.f32.mrb[0].mxu0
    %v1383 = vpop.f32.mrb[0].mxu0
    %v1384 = vadd.f32 %v1312, %v1383
    %v1385 = vpop.f32.mrb[0].mxu0
    %1386 = vmatprep.mubr.bf16.mxu0 0
    %1387 = vmatmul.mubr.bf16.gmra.mrb[0].mxu0 %v412
    %v1388 = vpop.f32.mrb[0].mxu0
    %v1389 = vadd.f32 %v1312, %v1388
    %v1390 = vpop.f32.mrb[0].mxu0
    %v1391 = vpop.f32.mrb[0].mxu0
    %v1392 = vadd.f32 %v1312, %v1391
    %v1393 = vpop.f32.mrb[0].mxu0
    %1394 = vmatprep.mubr.bf16.mxu0 0
    %1395 = vmatmul.mubr.bf16.gmra.mrb[0].mxu0 %v413
    %v1396 = vpop.f32.mrb[0].mxu0
    %v1397 = vadd.f32 %v1312, %v1396
    %v1398 = vpop.f32.mrb[0].mxu0
    %v1399 = vpop.f32.mrb[0].mxu0
    %v1400 = vadd.f32 %v1312, %v1399
    %v1401 = vpop.f32.mrb[0].mxu0
    %1402 = vmatprep.mubr.bf16.mxu0 0
    %1403 = vmatmul.mubr.bf16.gmra.mrb[0].mxu0 %v414
    %v1404 = vpop.f32.mrb[0].mxu0
    %v1405 = vadd.f32 %v1312, %v1404
    %v1406 = vpop.f32.mrb[0].mxu0
    %v1407 = vpop.f32.mrb[0].mxu0
    %v1408 = vadd.f32 %v1312, %v1407
    %v1409 = vpop.f32.mrb[0].mxu0
    %1410 = vdwg.mxu0
    %v1411 = vpack.c.bf16 %v1352, %v1349
    %v1412 = vpack.c.bf16 %v1360, %v1357
    %v1413 = vpack.c.bf16 %v1368, %v1365
    %v1414 = vpack.c.bf16 %v1376, %v1373
    %v1415 = vpack.c.bf16 %v1384, %v1381
    %v1416 = vpack.c.bf16 %v1392, %v1389
    %v1417 = vpack.c.bf16 %v1400, %v1397
    %v1418 = vpack.c.bf16 %v1408, %v1405
    %v1427 = vunpack.c.l.b16 %v1411
    %v1428 = vunpack.c.h.b16 %v1411
    %v1429 = vunpack.c.l.b16 %v1412
    %v1430 = vunpack.c.h.b16 %v1412
    %v1431 = vunpack.c.l.b16 %v1413
    %v1432 = vunpack.c.h.b16 %v1413
    %v1433 = vunpack.c.l.b16 %v1414
    %v1434 = vunpack.c.h.b16 %v1414
    %v1435 = vunpack.c.l.b16 %v1415
    %v1436 = vunpack.c.h.b16 %v1415
    %v1437 = vunpack.c.l.b16 %v1416
    %v1438 = vunpack.c.h.b16 %v1416
    %v1439 = vunpack.c.l.b16 %v1417
    %v1440 = vunpack.c.h.b16 %v1417
    %v1441 = vunpack.c.l.b16 %v1418
    %v1442 = vunpack.c.h.b16 %v1418
    %v1443 = vpack.c.b16 %v1427, %v1427
    %v1444 = vpack.c.b16 %v1428, %v1428
    %v1445 = vpack.c.b16 %v1429, %v1429
    %v1446 = vpack.c.b16 %v1430, %v1430
    %v1447 = vpack.c.b16 %v1431, %v1431
    %v1448 = vpack.c.b16 %v1432, %v1432
    %v1449 = vpack.c.b16 %v1433, %v1433
    %v1450 = vpack.c.b16 %v1434, %v1434
    %v1451 = vpack.c.b16 %v1435, %v1435
    %v1452 = vpack.c.b16 %v1436, %v1436
    %v1453 = vpack.c.b16 %v1437, %v1437
    %v1454 = vpack.c.b16 %v1438, %v1438
    %v1455 = vpack.c.b16 %v1439, %v1439
    %v1456 = vpack.c.b16 %v1440, %v1440
    %v1457 = vpack.c.b16 %v1441, %v1441
    %v1458 = vpack.c.b16 %v1442, %v1442
    %1475 = vst [vmem:[#allocation13] sm:$0xf] %v1443
    %1476 = vst [vmem:[#allocation13 + $0x4] sm:$0xf] %v1444
    %1477 = vst [vmem:[#allocation13 + $0x8] sm:$0xf] %v1445
    %1478 = vst [vmem:[#allocation13 + $0xc] sm:$0xf] %v1446
    %1479 = vst [vmem:[#allocation13 + $0x10] sm:$0xf] %v1447
    %1480 = vst [vmem:[#allocation13 + $0x14] sm:$0xf] %v1448
    %1481 = vst [vmem:[#allocation13 + $0x18] sm:$0xf] %v1449
    %1482 = vst [vmem:[#allocation13 + $0x1c] sm:$0xf] %v1450
    %1483 = vst [vmem:[#allocation13 + $0x20] sm:$0xf] %v1451
    %1484 = vst [vmem:[#allocation13 + $0x24] sm:$0xf] %v1452
    %1485 = vst [vmem:[#allocation13 + $0x28] sm:$0xf] %v1453
    %1486 = vst [vmem:[#allocation13 + $0x2c] sm:$0xf] %v1454
    %1487 = vst [vmem:[#allocation13 + $0x30] sm:$0xf] %v1455
    %1488 = vst [vmem:[#allocation13 + $0x34] sm:$0xf] %v1456
    %1489 = vst [vmem:[#allocation13 + $0x38] sm:$0xf] %v1457
    %1490 = vst [vmem:[#allocation13 + $0x3c] sm:$0xf] %v1458
    // Predicated region
    $region66: #{tpu_custom_call.1} parent=1 // pred_check
      _
    $region67: #{tpu_custom_call.1} parent=1 // pred_check_branch
      %1492 = sbr.rel (0) target = $region69
    $region68: #{tpu_custom_call.1} parent=1 // pred_region
      %s1494 = ssub.s32 1024, 1024
      %1495 = vsyncadd [#allocation4], %s1494
      %s1496 = sshll.u32 [#allocation13], 4
      %s1497 = int_to_ptr.vmem [resolvable:$true] %s1496
      %1502 = dma.vmem_to_hbm [thread:$0]  %s1497, 1024, %s10, [#allocation4], 64, 64, 4
    $region69: #{tpu_custom_call.1} parent=1 // pred_fallthru
      _
    // Predicated region
    $region70: #{tpu_custom_call.1} parent=1 // pred_check
      _
    $region71: #{tpu_custom_call.1} parent=1 // pred_check_branch
      %1504 = sbr.rel (0) target = $region73
    $region72: #{tpu_custom_call.1} parent=1 // pred_region
      %1505 = dma.done [#allocation4], 1024
    $region73: #{tpu_custom_call.1} parent=1 // pred_fallthru
      _
    %1506 = vsyncpa [#allocation3], 1
    %1507 = vsyncpa [#allocation6], 1
    %1508 = vsyncpa [#allocation9], 1
    %1509 = vsyncpa [#allocation12], 1
    %1510 = vsyncpa [#allocation4], 1

</llo_original>
